<compile_context>
chip_gen: v7x
topology: tpu7x:2x2x1
jax: 0.10.0
libtpu: 0.0.40
codegen_flags: <defaults>
</compile_context>

<pallas_src>
import functools

import numpy as np
import jax
import jax.numpy as jnp
from jax.experimental import pallas as pl
from jax.experimental.pallas import tpu as pltpu


def _round_up(x, m):
    return ((x + m - 1) // m) * m


def _device_kind():
    try:
        return jax.devices()[0].device_kind.lower()
    except Exception:
        return ""


def _default_elem_dtype():
    kind = _device_kind()
    if "v6" in kind or "v7" in kind:
        return jnp.bfloat16      # bf16 VPU/XLU path: packed vregs, less work
    return jnp.float32           # v4/v5*: no bf16 VPU -> keep elementwise f32


def _adaptive_cnn_kernel(x_ref, w1_ref, b1_ref, w2_ref, b2_ref,
                         wfc_ref, bfc_ref, out_ref, *, tokens, elem_dtype):
    T = tokens
    dt = elem_dtype
    x = x_ref[...].astype(jnp.bfloat16)          # in-kernel cast (x is f32 in HBM)
    R = x.shape[0]
    Bt = R // T
    C1p = b1_ref.shape[-1]                       # conv1 tap width, padded to 128
    C2p = b2_ref.shape[-1]                       # conv2 tap width, padded to 128

    # Token index *within* each batch row; reused by every padding / pooling
    # mask so sublane rolls never leak across batch rows.  NOTE: roll values
    # that wrap at row 0 / row R-1 / odd-T tails are always masked out before
    # reaching a valid output -- do not edit these masks without re-checking
    # odd T and T % 4 != 0.
    t = jax.lax.broadcasted_iota(jnp.int32, (R, 1), 0) % T

    # ---- conv1: Conv2d(1, C1, (3, E), padding=(1, 0)) + ReLU ----------------
    # One fused MXU matmul; the 3 kh taps sit at lane offsets 0/C1p/2*C1p so
    # the slices below are vreg-aligned (no lane rotates).
    p = jnp.dot(x, w1_ref[...], preferred_element_type=jnp.float32).astype(dt)
    p0, p1, p2 = p[:, :C1p], p[:, C1p:2 * C1p], p[:, 2 * C1p:]
    y = p1
    y = y + jnp.where(t >= 1,     pltpu.roll(p0, 1,     axis=0), 0.0)  # tap t-1
    y = y + jnp.where(t <= T - 2, pltpu.roll(p2, R - 1, axis=0), 0.0)  # tap t+1
    y = jnp.maximum(y + b1_ref[...].astype(dt), 0.0)                   # (R, C1p)

    # ---- max_pool2d (2, 1): valid result lives at even local token rows -----
    m1 = jnp.maximum(y, pltpu.roll(y, R - 1, axis=0))

    # ---- conv2: Conv2d(C1, C2, (3, 1), padding=(1, 0)) + ReLU ---------------
    # Runs on the (uncompacted) pooled grid: valid rows are even local t, so
    # the kh taps become stride-2 rolls.  Fused, lane-aligned taps.
    # TODO(synk): if profiling ever shows this MXU-bound (large C1/C2/T),
    # compact the pooled rows to R/2 before this matmul.
    q = jnp.dot(m1.astype(jnp.bfloat16), w2_ref[...],
                preferred_element_type=jnp.float32).astype(dt)         # (R, 3*C2p)
    q0, q1, q2 = q[:, :C2p], q[:, C2p:2 * C2p], q[:, 2 * C2p:]
    z = q1
    z = z + jnp.where(t >= 2,     pltpu.roll(q0, 2,     axis=0), 0.0)
    z = z + jnp.where(t <= T - 4, pltpu.roll(q2, R - 2, axis=0), 0.0)
    z = jnp.maximum(z + b2_ref[...].astype(dt), 0.0)    # valid @ even local rows

    # ---- second max_pool2d (2, 1): valid at local rows t % 4 == 0 -----------
    m2 = jnp.maximum(z, pltpu.roll(z, R - 2, axis=0))

    # ---- AdaptiveAvgPool2d((1, 1)) as an MXU segment-sum --------------------
    # seg[b, r] = 1/T4 iff row r belongs to batch row b and its local token
    # index is a valid pool-2 row (t % 4 == 0, t < 4*T4).  Keeps m2 in its
    # existing layout and puts the cross-row reduction on the idle MXU.
    T4 = T // 4
    r_idx = jax.lax.broadcasted_iota(jnp.int32, (Bt, R), 1)
    b_idx = jax.lax.broadcasted_iota(jnp.int32, (Bt, R), 0)
    local = r_idx - b_idx * T
    valid = (local >= 0) & (local < 4 * T4) & (local % 4 == 0)
    seg = valid.astype(jnp.bfloat16) * (1.0 / T4)                      # (Bt, R)
    pooled = jnp.dot(seg, m2.astype(jnp.bfloat16),
                     preferred_element_type=jnp.float32)               # (Bt, C2p)

    # ---- fc: Linear(C2, num_classes) ----------------------------------------
    # TODO(synk): output lanes stay NC (<128); pad to 128 + wrapper slice only
    # if output-store stalls ever show up in a profile.
    out_ref[...] = (jnp.dot(pooled.astype(jnp.bfloat16), wfc_ref[...],
                            preferred_element_type=jnp.float32)
                    + bfc_ref[...])


def _pick_block_batch(B, T, E, C1p, C2p, elem_bytes, vmem_budget, two_cores):
    """Largest Bt (dividing B, sublane-legal) whose per-block VMEM estimate
    stays under `vmem_budget`, preferring enough grid steps to keep every
    TensorCore pipelined (>= 4 steps on 2-core parts, >= 2 otherwise)."""
    def est_bytes(bt):
        rows = bt * T
        per_row = (2 * E * 4               # f32 input block, double-buffered
                   + E * 2                 # in-kernel bf16 cast of x
                   + 3 * C1p * 4           # p (f32 MXU accumulation)
                   + 4 * C1p * elem_bytes  # tap temps / y / m1
                   + 3 * C2p * 4           # q
                   + 4 * C2p * elem_bytes  # tap temps / z / m2
                   + C2p * 2)              # m2 bf16 copy for the seg matmul
        seg = bt * rows * (2 + 12)         # seg bf16 + iota / compare temps
        return rows * per_row + seg

    def legal(bt):
        rows = bt * T
        return (B % bt == 0
                and (bt % 8 == 0 or bt == B)
                and (rows % 8 == 0 or bt == B))

    cands = [bt for bt in range(1, B + 1)
             if legal(bt) and est_bytes(bt) <= vmem_budget]
    if not cands:
        return B                           # single full-array block (always legal)
    steps_pref = (4, 2, 1) if two_cores else (2, 1)
    for min_steps in steps_pref:
        grp = [bt for bt in cands if B // bt >= min_steps]
        if grp:
            return max(grp)
    return max(cands)


def adaptive_token_embedding_cnn(x, params, *, block_batch=None, elem_dtype=None):
    """x: (B, T, E) float32.  params: PyTorch-layout weights
    (W1 (C1,1,3,E), B1 (C1,), W2 (C2,C1,3,1), B2 (C2,), Wfc (NC,C2), Bfc (NC,)).
    """
    W1, B1, W2, B2, Wfc, Bfc = params
    B, T, E = x.shape
    if T < 4:
        # Two (2,1) max-pools need T >= 4 (PyTorch would also reject T < 4).
        raise ValueError("AdaptiveTokenEmbeddingCNN kernel requires T >= 4")
    C1, C2, NC = W1.shape[0], W2.shape[0], Wfc.shape[0]
    C1p, C2p = _round_up(C1, 128), _round_up(C2, 128)

    kind = _device_kind()
    if elem_dtype is None:
        elem_dtype = _default_elem_dtype()
    elem_bytes = jnp.dtype(elem_dtype).itemsize

    # Per-generation block VMEM budget; the scoped limit is raised explicitly.
    if "v5" in kind or "v4" in kind:
        vmem_budget = 20 << 20             # v5e scoped default is only 16 MiB
    elif "v7" in kind:
        vmem_budget = 24 << 20             # v7x: 64 MiB physical VMEM per core
    else:
        vmem_budget = 28 << 20             # v6e: 128 MiB physical
    two_cores = "v7" in kind
    vmem_limit = min(56 << 20, max(32 << 20, 2 * vmem_budget))

    Bt = (_pick_block_batch(B, T, E, C1p, C2p, elem_bytes, vmem_budget, two_cores)
          if block_batch is None else block_batch)
    grid = (B // Bt,)
    rows = Bt * T

    # Input stays f32; the bf16 cast happens inside the kernel (no extra
    # wrapper-side HBM pass over the activations).  reshape is metadata-only.
    x2d = x.reshape(B * T, E).astype(jnp.float32)

    # Conv taps concatenated on the output-channel axis, each tap zero-padded
    # to start at a 128-lane boundary.  Weights are tiny; one-time packing.
    w1c = jnp.zeros((E, 3 * C1p), jnp.float32)
    w2c = jnp.zeros((C1p, 3 * C2p), jnp.float32)
    for kh in range(3):
        w1c = w1c.at[:, kh * C1p:kh * C1p + C1].set(W1[:, 0, kh, :].T)
        w2c = w2c.at[:C1, kh * C2p:kh * C2p + C2].set(W2[:, :, kh, 0].T)
    w1c = w1c.astype(jnp.bfloat16)                                    # (E, 3*C1p)
    w2c = w2c.astype(jnp.bfloat16)                                    # (C1p, 3*C2p)
    wfc = (jnp.zeros((C2p, NC), jnp.float32).at[:C2, :].set(Wfc.T)
           .astype(jnp.bfloat16))                                     # (C2p, NC)
    b1 = jnp.zeros((1, C1p), jnp.float32).at[0, :C1].set(B1)
    b2 = jnp.zeros((1, C2p), jnp.float32).at[0, :C2].set(B2)
    bfc = Bfc.reshape(1, NC).astype(jnp.float32)

    cost = pl.CostEstimate(
        flops=2 * B * T * (E * 3 * C1p + C1p * 3 * C2p + C2p) + 2 * B * C2p * NC,
        transcendentals=0,
        bytes_accessed=(x2d.size * 4 + w1c.size * 2 + w2c.size * 2
                        + wfc.size * 2 + (C1p + C2p + NC) * 4 + B * NC * 4),
    )

    kernel = functools.partial(_adaptive_cnn_kernel, tokens=T,
                               elem_dtype=elem_dtype)
    return pl.pallas_call(
        kernel,
        out_shape=jax.ShapeDtypeStruct((B, NC), jnp.float32),
        grid_spec=pltpu.PrefetchScalarGridSpec(
            num_scalar_prefetch=0,
            grid=grid,
            in_specs=[
                pl.BlockSpec((rows, E),      lambda i: (i, 0)),  # x (f32), Bt rows
                pl.BlockSpec((E, 3 * C1p),   lambda i: (0, 0)),  # conv1 fused taps
                pl.BlockSpec((1, C1p),       lambda i: (0, 0)),  # conv1 bias (padded)
                pl.BlockSpec((C1p, 3 * C2p), lambda i: (0, 0)),  # conv2 fused taps
                pl.BlockSpec((1, C2p),       lambda i: (0, 0)),  # conv2 bias (padded)
                pl.BlockSpec((C2p, NC),      lambda i: (0, 0)),  # fc weight
                pl.BlockSpec((1, NC),        lambda i: (0, 0)),  # fc bias
            ],
            out_specs=pl.BlockSpec((Bt, NC), lambda i: (i, 0)),
        ),
        compiler_params=pltpu.CompilerParams(
            dimension_semantics=("parallel",),
            vmem_limit_bytes=vmem_limit),
        cost_estimate=cost,
    )(x2d, w1c, b1, w2c, b2, wfc, bfc)


def reference_forward(x, W1, B1, W2, B2, Wfc, Bfc):
    """Pure-JAX f32 replica of the PyTorch forward (NCHW), for verification."""
    xi = x[:, None, :, :]                                    # (B, 1, T, E)
    dn = ('NCHW', 'OIHW', 'NCHW')
    y = jax.lax.conv_general_dilated(xi, W1, (1, 1), ((1, 1), (0, 0)),
                                     dimension_numbers=dn)
    y = jax.nn.relu(y + B1.reshape(1, -1, 1, 1))
    y = jax.lax.reduce_window(y, -jnp.inf, jax.lax.max,
                              (1, 1, 2, 1), (1, 1, 2, 1), 'VALID')
    z = jax.lax.conv_general_dilated(y, W2, (1, 1), ((1, 1), (0, 0)),
                                     dimension_numbers=dn)
    z = jax.nn.relu(z + B2.reshape(1, -1, 1, 1))
    z = jax.lax.reduce_window(z, -jnp.inf, jax.lax.max,
                              (1, 1, 2, 1), (1, 1, 2, 1), 'VALID')
    pooled = z.mean(axis=(2, 3))                             # (B, C2)
    return pooled @ Wfc.T + Bfc


if __name__ == "__main__":
    # Small, TPU-friendly shapes consistent with the module:
    #   batch B=16, tokens T=8, embedding_dim E=32, num_classes NC=16.
    B, T, E, NC = 16, 8, 32, 16
    key = jax.random.PRNGKey(0)
    k1, k2, k3, k4, k5, k6, k7 = jax.random.split(key, 7)

    # Deterministic parameters in PyTorch layouts (OIHW convs, (out,in) linear).
    W1 = jax.random.normal(k1, (32, 1, 3, E), jnp.float32) * 0.1
    B1 = jax.random.normal(k2, (32,), jnp.float32) * 0.1
    W2 = jax.random.normal(k3, (64, 32, 3, 1), jnp.float32) * 0.1
    B2 = jax.random.normal(k4, (64,), jnp.float32) * 0.1
    Wfc = jax.random.normal(k5, (NC, 64), jnp.float32) * 0.1
    Bfc = jax.random.normal(k6, (NC,), jnp.float32) * 0.1
    x = jax.random.normal(k7, (B, T, E), jnp.float32)

    out = adaptive_token_embedding_cnn(x, (W1, B1, W2, B2, Wfc, Bfc))
    out = jax.block_until_ready(out)
    assert out.shape == (B, NC) and out.dtype == jnp.float32

    # bf16 MXU operands (and, on v6e/v7x, bf16 elementwise) vs. the f32 ref ->
    # loosened tolerance; this is an intentional precision trade, not a bug.
    ref = reference_forward(x, W1, B1, W2, B2, Wfc, Bfc)
    np.testing.assert_allclose(np.asarray(out), np.asarray(ref),
                               rtol=3e-2, atol=3e-2)
    print("KERNEL_OK")
</pallas_src>

<mosaic_0001>
module attributes {stable_mosaic.version = 11 : i64} {
  func.func @_adaptive_cnn_kernel(%arg0: i32, %arg1: memref<64x32xf32, #tpu.memory_space<vmem>>, %arg2: memref<32x384xbf16, #tpu.memory_space<vmem>>, %arg3: memref<1x128xf32, #tpu.memory_space<vmem>>, %arg4: memref<128x384xbf16, #tpu.memory_space<vmem>>, %arg5: memref<1x128xf32, #tpu.memory_space<vmem>>, %arg6: memref<128x16xbf16, #tpu.memory_space<vmem>>, %arg7: memref<1x16xf32, #tpu.memory_space<vmem>>, %arg8: memref<8x16xf32, #tpu.memory_space<vmem>>) attributes {dimension_semantics = [#tpu.dimension_semantics<parallel>], iteration_bounds = array<i64: 2>, scalar_prefetch = 0 : i64, scratch_operands = 0 : i64, tpu.core_type = #tpu.core_type<tc>, window_params = [{transform_indices = @transform_0, window_bounds = array<i64: 64, 32>}, {pipeline_mode = #tpu.pipeline_mode<synchronous>, transform_indices = @transform_1, window_bounds = array<i64: 32, 384>}, {pipeline_mode = #tpu.pipeline_mode<synchronous>, transform_indices = @transform_2, window_bounds = array<i64: 1, 128>}, {pipeline_mode = #tpu.pipeline_mode<synchronous>, transform_indices = @transform_3, window_bounds = array<i64: 128, 384>}, {pipeline_mode = #tpu.pipeline_mode<synchronous>, transform_indices = @transform_4, window_bounds = array<i64: 1, 128>}, {pipeline_mode = #tpu.pipeline_mode<synchronous>, transform_indices = @transform_5, window_bounds = array<i64: 128, 16>}, {pipeline_mode = #tpu.pipeline_mode<synchronous>, transform_indices = @transform_6, window_bounds = array<i64: 1, 16>}, {transform_indices = @transform_7, window_bounds = array<i64: 8, 16>}]} {
    %c0 = arith.constant 0 : index
    %c0_0 = arith.constant 0 : index
    %0 = vector.load %arg1[%c0, %c0_0] : memref<64x32xf32, #tpu.memory_space<vmem>>, vector<64x32xf32>
    %1 = arith.truncf %0 : vector<64x32xf32> to vector<64x32xbf16>
    %2 = tpu.iota {dimensions = array<i32: 0>} : vector<64x1xi32>
    %c8_i32 = arith.constant 8 : i32
    %c0_i32 = arith.constant 0 : i32
    %3 = arith.cmpi eq, %c8_i32, %c0_i32 : i32
    %c1_i32 = arith.constant 1 : i32
    %4 = arith.select %3, %c1_i32, %c8_i32 : i32
    %5 = vector.broadcast %4 : i32 to vector<64x1xi32>
    %6 = arith.remsi %2, %5 : vector<64x1xi32>
    %c0_i32_1 = arith.constant 0 : i32
    %7 = vector.broadcast %c0_i32_1 : i32 to vector<64x1xi32>
    %8 = arith.cmpi ne, %6, %7 : vector<64x1xi32>
    %c0_i32_2 = arith.constant 0 : i32
    %9 = vector.broadcast %c0_i32_2 : i32 to vector<64x1xi32>
    %10 = arith.cmpi slt, %6, %9 : vector<64x1xi32>
    %c0_i32_3 = arith.constant 0 : i32
    %11 = arith.cmpi slt, %4, %c0_i32_3 : i32
    %12 = vector.broadcast %11 : i1 to vector<64x1xi1>
    %13 = vector.broadcast %12 : vector<64x1xi1> to vector<64x1xi1>
    %14 = arith.xori %10, %13 : vector<64x1xi1>
    %15 = arith.andi %14, %8 : vector<64x1xi1>
    %16 = vector.broadcast %4 : i32 to vector<64x1xi32>
    %17 = arith.addi %6, %16 : vector<64x1xi32>
    %18 = arith.select %15, %17, %6 : vector<64x1xi1>, vector<64x1xi32>
    %c0_4 = arith.constant 0 : index
    %c0_5 = arith.constant 0 : index
    %19 = vector.load %arg2[%c0_4, %c0_5] : memref<32x384xbf16, #tpu.memory_space<vmem>>, vector<32x384xbf16>
    %cst = arith.constant dense<0.000000e+00> : vector<64x384xf32>
    %20 = tpu.matmul %1, %19, %cst {dimension_numbers = #tpu.dot_dimension_numbers<[1], [0], [0], [1], [0, 0, 1, 1], [], []>} : vector<64x32xbf16>, vector<32x384xbf16>, vector<64x384xf32> -> vector<64x384xf32>
    %21 = vector.extract_strided_slice %20 {offsets = [0, 0], sizes = [64, 128], strides = [1, 1]} : vector<64x384xf32> to vector<64x128xf32>
    %22 = vector.extract_strided_slice %20 {offsets = [0, 128], sizes = [64, 128], strides = [1, 1]} : vector<64x384xf32> to vector<64x128xf32>
    %23 = vector.extract_strided_slice %20 {offsets = [0, 256], sizes = [64, 128], strides = [1, 1]} : vector<64x384xf32> to vector<64x128xf32>
    %c1_i32_6 = arith.constant 1 : i32
    %24 = vector.broadcast %c1_i32_6 : i32 to vector<64x1xi32>
    %25 = arith.cmpi sge, %18, %24 : vector<64x1xi32>
    %c1_i32_7 = arith.constant 1 : i32
    %26 = tpu.dynamic_rotate %21 by %c1_i32_7 dim 0 : vector<64x128xf32>, i32 -> vector<64x128xf32>
    %cst_8 = arith.constant 0.000000e+00 : f32
    %27 = vector.shape_cast %25 : vector<64x1xi1> to vector<64x1xi1>
    %28 = vector.broadcast %27 : vector<64x1xi1> to vector<64x128xi1>
    %29 = vector.broadcast %cst_8 : f32 to vector<64x128xf32>
    %30 = arith.select %28, %26, %29 : vector<64x128xi1>, vector<64x128xf32>
    %31 = arith.addf %22, %30 : vector<64x128xf32>
    %c6_i32 = arith.constant 6 : i32
    %32 = vector.broadcast %c6_i32 : i32 to vector<64x1xi32>
    %33 = arith.cmpi sle, %18, %32 : vector<64x1xi32>
    %c63_i32 = arith.constant 63 : i32
    %34 = tpu.dynamic_rotate %23 by %c63_i32 dim 0 : vector<64x128xf32>, i32 -> vector<64x128xf32>
    %cst_9 = arith.constant 0.000000e+00 : f32
    %35 = vector.shape_cast %33 : vector<64x1xi1> to vector<64x1xi1>
    %36 = vector.broadcast %35 : vector<64x1xi1> to vector<64x128xi1>
    %37 = vector.broadcast %cst_9 : f32 to vector<64x128xf32>
    %38 = arith.select %36, %34, %37 : vector<64x128xi1>, vector<64x128xf32>
    %39 = arith.addf %31, %38 : vector<64x128xf32>
    %c0_10 = arith.constant 0 : index
    %c0_11 = arith.constant 0 : index
    %40 = vector.load %arg3[%c0_10, %c0_11] : memref<1x128xf32, #tpu.memory_space<vmem>>, vector<1x128xf32>
    %41 = vector.broadcast %40 : vector<1x128xf32> to vector<64x128xf32>
    %42 = arith.addf %39, %41 : vector<64x128xf32>
    %cst_12 = arith.constant 0.000000e+00 : f32
    %43 = vector.broadcast %cst_12 : f32 to vector<64x128xf32>
    %44 = arith.maximumf %42, %43 : vector<64x128xf32>
    %c63_i32_13 = arith.constant 63 : i32
    %45 = tpu.dynamic_rotate %44 by %c63_i32_13 dim 0 : vector<64x128xf32>, i32 -> vector<64x128xf32>
    %46 = arith.maximumf %44, %45 : vector<64x128xf32>
    %47 = arith.truncf %46 : vector<64x128xf32> to vector<64x128xbf16>
    %c0_14 = arith.constant 0 : index
    %c0_15 = arith.constant 0 : index
    %48 = vector.load %arg4[%c0_14, %c0_15] : memref<128x384xbf16, #tpu.memory_space<vmem>>, vector<128x384xbf16>
    %cst_16 = arith.constant dense<0.000000e+00> : vector<64x384xf32>
    %49 = tpu.matmul %47, %48, %cst_16 {dimension_numbers = #tpu.dot_dimension_numbers<[1], [0], [0], [1], [0, 0, 1, 1], [], []>} : vector<64x128xbf16>, vector<128x384xbf16>, vector<64x384xf32> -> vector<64x384xf32>
    %50 = vector.extract_strided_slice %49 {offsets = [0, 0], sizes = [64, 128], strides = [1, 1]} : vector<64x384xf32> to vector<64x128xf32>
    %51 = vector.extract_strided_slice %49 {offsets = [0, 128], sizes = [64, 128], strides = [1, 1]} : vector<64x384xf32> to vector<64x128xf32>
    %52 = vector.extract_strided_slice %49 {offsets = [0, 256], sizes = [64, 128], strides = [1, 1]} : vector<64x384xf32> to vector<64x128xf32>
    %c2_i32 = arith.constant 2 : i32
    %53 = vector.broadcast %c2_i32 : i32 to vector<64x1xi32>
    %54 = arith.cmpi sge, %18, %53 : vector<64x1xi32>
    %c2_i32_17 = arith.constant 2 : i32
    %55 = tpu.dynamic_rotate %50 by %c2_i32_17 dim 0 : vector<64x128xf32>, i32 -> vector<64x128xf32>
    %cst_18 = arith.constant 0.000000e+00 : f32
    %56 = vector.shape_cast %54 : vector<64x1xi1> to vector<64x1xi1>
    %57 = vector.broadcast %56 : vector<64x1xi1> to vector<64x128xi1>
    %58 = vector.broadcast %cst_18 : f32 to vector<64x128xf32>
    %59 = arith.select %57, %55, %58 : vector<64x128xi1>, vector<64x128xf32>
    %60 = arith.addf %51, %59 : vector<64x128xf32>
    %c4_i32 = arith.constant 4 : i32
    %61 = vector.broadcast %c4_i32 : i32 to vector<64x1xi32>
    %62 = arith.cmpi sle, %18, %61 : vector<64x1xi32>
    %c62_i32 = arith.constant 62 : i32
    %63 = tpu.dynamic_rotate %52 by %c62_i32 dim 0 : vector<64x128xf32>, i32 -> vector<64x128xf32>
    %cst_19 = arith.constant 0.000000e+00 : f32
    %64 = vector.shape_cast %62 : vector<64x1xi1> to vector<64x1xi1>
    %65 = vector.broadcast %64 : vector<64x1xi1> to vector<64x128xi1>
    %66 = vector.broadcast %cst_19 : f32 to vector<64x128xf32>
    %67 = arith.select %65, %63, %66 : vector<64x128xi1>, vector<64x128xf32>
    %68 = arith.addf %60, %67 : vector<64x128xf32>
    %c0_20 = arith.constant 0 : index
    %c0_21 = arith.constant 0 : index
    %69 = vector.load %arg5[%c0_20, %c0_21] : memref<1x128xf32, #tpu.memory_space<vmem>>, vector<1x128xf32>
    %70 = vector.broadcast %69 : vector<1x128xf32> to vector<64x128xf32>
    %71 = arith.addf %68, %70 : vector<64x128xf32>
    %cst_22 = arith.constant 0.000000e+00 : f32
    %72 = vector.broadcast %cst_22 : f32 to vector<64x128xf32>
    %73 = arith.maximumf %71, %72 : vector<64x128xf32>
    %c62_i32_23 = arith.constant 62 : i32
    %74 = tpu.dynamic_rotate %73 by %c62_i32_23 dim 0 : vector<64x128xf32>, i32 -> vector<64x128xf32>
    %75 = arith.maximumf %73, %74 : vector<64x128xf32>
    %76 = tpu.iota {dimensions = array<i32: 1>} : vector<8x64xi32>
    %77 = tpu.iota {dimensions = array<i32: 0>} : vector<8x64xi32>
    %c8_i32_24 = arith.constant 8 : i32
    %78 = vector.broadcast %c8_i32_24 : i32 to vector<8x64xi32>
    %79 = arith.muli %77, %78 : vector<8x64xi32>
    %80 = arith.subi %76, %79 : vector<8x64xi32>
    %c0_i32_25 = arith.constant 0 : i32
    %81 = vector.broadcast %c0_i32_25 : i32 to vector<8x64xi32>
    %82 = arith.cmpi sge, %80, %81 : vector<8x64xi32>
    %c8_i32_26 = arith.constant 8 : i32
    %83 = vector.broadcast %c8_i32_26 : i32 to vector<8x64xi32>
    %84 = arith.cmpi slt, %80, %83 : vector<8x64xi32>
    %85 = arith.andi %82, %84 : vector<8x64xi1>
    %c4_i32_27 = arith.constant 4 : i32
    %c0_i32_28 = arith.constant 0 : i32
    %86 = arith.cmpi eq, %c4_i32_27, %c0_i32_28 : i32
    %c1_i32_29 = arith.constant 1 : i32
    %87 = arith.select %86, %c1_i32_29, %c4_i32_27 : i32
    %88 = vector.broadcast %87 : i32 to vector<8x64xi32>
    %89 = arith.remsi %80, %88 : vector<8x64xi32>
    %c0_i32_30 = arith.constant 0 : i32
    %90 = vector.broadcast %c0_i32_30 : i32 to vector<8x64xi32>
    %91 = arith.cmpi ne, %89, %90 : vector<8x64xi32>
    %c0_i32_31 = arith.constant 0 : i32
    %92 = vector.broadcast %c0_i32_31 : i32 to vector<8x64xi32>
    %93 = arith.cmpi slt, %89, %92 : vector<8x64xi32>
    %c0_i32_32 = arith.constant 0 : i32
    %94 = arith.cmpi slt, %87, %c0_i32_32 : i32
    %95 = vector.broadcast %94 : i1 to vector<8x64xi1>
    %96 = vector.broadcast %95 : vector<8x64xi1> to vector<8x64xi1>
    %97 = arith.xori %93, %96 : vector<8x64xi1>
    %98 = arith.andi %97, %91 : vector<8x64xi1>
    %99 = vector.broadcast %87 : i32 to vector<8x64xi32>
    %100 = arith.addi %89, %99 : vector<8x64xi32>
    %101 = arith.select %98, %100, %89 : vector<8x64xi1>, vector<8x64xi32>
    %c0_i32_33 = arith.constant 0 : i32
    %102 = vector.broadcast %c0_i32_33 : i32 to vector<8x64xi32>
    %103 = arith.cmpi eq, %101, %102 : vector<8x64xi32>
    %104 = arith.andi %85, %103 : vector<8x64xi1>
    %105 = arith.extui %104 : vector<8x64xi1> to vector<8x64xi32>
    %106 = arith.sitofp %105 : vector<8x64xi32> to vector<8x64xf32>
    %107 = arith.truncf %106 : vector<8x64xf32> to vector<8x64xbf16>
    %cst_34 = arith.constant 5.000000e-01 : bf16
    %108 = vector.broadcast %cst_34 : bf16 to vector<8x64xbf16>
    %109 = arith.mulf %107, %108 : vector<8x64xbf16>
    %110 = arith.truncf %75 : vector<64x128xf32> to vector<64x128xbf16>
    %cst_35 = arith.constant dense<0.000000e+00> : vector<8x128xf32>
    %111 = tpu.matmul %109, %110, %cst_35 {dimension_numbers = #tpu.dot_dimension_numbers<[1], [0], [0], [1], [0, 0, 1, 1], [], []>} : vector<8x64xbf16>, vector<64x128xbf16>, vector<8x128xf32> -> vector<8x128xf32>
    %112 = arith.truncf %111 : vector<8x128xf32> to vector<8x128xbf16>
    %c0_36 = arith.constant 0 : index
    %c0_37 = arith.constant 0 : index
    %113 = vector.load %arg6[%c0_36, %c0_37] : memref<128x16xbf16, #tpu.memory_space<vmem>>, vector<128x16xbf16>
    %cst_38 = arith.constant dense<0.000000e+00> : vector<8x16xf32>
    %114 = tpu.matmul %112, %113, %cst_38 {dimension_numbers = #tpu.dot_dimension_numbers<[1], [0], [0], [1], [0, 0, 1, 1], [], []>} : vector<8x128xbf16>, vector<128x16xbf16>, vector<8x16xf32> -> vector<8x16xf32>
    %c0_39 = arith.constant 0 : index
    %c0_40 = arith.constant 0 : index
    %115 = vector.load %arg7[%c0_39, %c0_40] : memref<1x16xf32, #tpu.memory_space<vmem>>, vector<1x16xf32>
    %116 = vector.broadcast %115 : vector<1x16xf32> to vector<8x16xf32>
    %117 = arith.addf %114, %116 : vector<8x16xf32>
    %c0_41 = arith.constant 0 : index
    %c0_42 = arith.constant 0 : index
    %118 = vector.load %arg8[%c0_41, %c0_42] : memref<8x16xf32, #tpu.memory_space<vmem>>, vector<8x16xf32>
    tpu.vector_store %arg8[%c0_41, %c0_42], %117 {strides = array<i32>} : memref<8x16xf32, #tpu.memory_space<vmem>>, vector<8x16xf32>,
    return
  }
  func.func @transform_0(%arg0: i32) -> (i32, i32) {
    %c0_i32 = arith.constant 0 : i32
    %c0_i32_0 = arith.constant 0 : i32
    return %arg0, %c0_i32 : i32, i32
  }
  func.func @transform_1(%arg0: i32) -> (i32, i32) {
    %c0_i32 = arith.constant 0 : i32
    %c0_i32_0 = arith.constant 0 : i32
    %c0_i32_1 = arith.constant 0 : i32
    return %c0_i32, %c0_i32_0 : i32, i32
  }
  func.func @transform_2(%arg0: i32) -> (i32, i32) {
    %c0_i32 = arith.constant 0 : i32
    %c0_i32_0 = arith.constant 0 : i32
    %c0_i32_1 = arith.constant 0 : i32
    return %c0_i32, %c0_i32_0 : i32, i32
  }
  func.func @transform_3(%arg0: i32) -> (i32, i32) {
    %c0_i32 = arith.constant 0 : i32
    %c0_i32_0 = arith.constant 0 : i32
    %c0_i32_1 = arith.constant 0 : i32
    return %c0_i32, %c0_i32_0 : i32, i32
  }
  func.func @transform_4(%arg0: i32) -> (i32, i32) {
    %c0_i32 = arith.constant 0 : i32
    %c0_i32_0 = arith.constant 0 : i32
    %c0_i32_1 = arith.constant 0 : i32
    return %c0_i32, %c0_i32_0 : i32, i32
  }
  func.func @transform_5(%arg0: i32) -> (i32, i32) {
    %c0_i32 = arith.constant 0 : i32
    %c0_i32_0 = arith.constant 0 : i32
    %c0_i32_1 = arith.constant 0 : i32
    return %c0_i32, %c0_i32_0 : i32, i32
  }
  func.func @transform_6(%arg0: i32) -> (i32, i32) {
    %c0_i32 = arith.constant 0 : i32
    %c0_i32_0 = arith.constant 0 : i32
    %c0_i32_1 = arith.constant 0 : i32
    return %c0_i32, %c0_i32_0 : i32, i32
  }
  func.func @transform_7(%arg0: i32) -> (i32, i32) {
    %c0_i32 = arith.constant 0 : i32
    %c0_i32_0 = arith.constant 0 : i32
    return %arg0, %c0_i32 : i32, i32
  }
}

</mosaic_0001>

<llo_original>
// kernel: tpu_custom_call.1
$region0: #{tpu_custom_call.1}
  #allocation0 [shape = 'u32[]', space=smem, size = 0x4, offset = 0x4, fixed_abs, tag = 'smem constant byte address 0x4 - core index']
  #allocation1 [shape = 'u32[144,128]{1,0:T(1,128)}', space=vmem, size = 0x12000, scoped, tag = 'internal scratch']
  %s0 = inlined_call_operand.vmem [shape: f32[128,32], index: 0, kind: input, shape index: {}]
  %s1 = inlined_call_operand.vmem [shape: bf16[32,384], index: 1, kind: input, shape index: {}]
  %s2 = inlined_call_operand.vmem [shape: f32[1,128], index: 2, kind: input, shape index: {}]
  %s3 = inlined_call_operand.vmem [shape: bf16[128,384], index: 3, kind: input, shape index: {}]
  %s4 = inlined_call_operand.vmem [shape: f32[1,128], index: 4, kind: input, shape index: {}]
  %s5 = inlined_call_operand.vmem [shape: bf16[128,16], index: 5, kind: input, shape index: {}]
  %s6 = inlined_call_operand.vmem [shape: f32[1,16], index: 6, kind: input, shape index: {}]
  %s7 = inlined_call_operand.hbm [shape: f32[16,16], index: 7, kind: output, shape index: {}]
  %s8 = sld [smem:[#allocation0]]
  $region61: #{tpu_custom_call.1} parent=0
    _
  %s10 = ssub.s32 1, %s8
  %s11 = scalar_select 0, %s10, %s8
  $region1: #{tpu_custom_call.1} parent=0
    #allocation2 [shape = 'u8[8192]{0}', space=vmem, size = 0x2000, scoped, tag = 'output window, operand 0']
    #allocation3 [shape = 's32[2]{0}', space=sflag, size = 0x8, scoped, tag = 'scoped memory for tpu_custom_call.1']
    %12 = vsyncpa [#allocation3], 0
    %s13 = scalar_lea.sflag [#allocation3], 1
    %14 = vsyncpa %s13, 0
    loop: start=0, step=1, limit=4
    $region2: #{tpu_custom_call.1} parent=1 // loop_pre_header
      _
    $region3: #{tpu_custom_call.1} parent=1 // loop_header
      %s16 = sphi 0, %s20
      %p17 = scmp.ge.s32.totalorder %s16, 4
      %s26 = sphi 0, %s28
      %s29 = sphi 0, %s26
      %s30 = sphi 0, %s29
      %s46 = sphi 0, %s30
      %s50 = sphi 0, %s50
      %s52 = sphi 0, %s50
      %s53 = sphi 0, %s52
      %s67 = sphi 0, %s53
      %s71 = sphi 0, %s71
      %s73 = sphi 0, %s71
      %s74 = sphi 0, %s73
      %s88 = sphi 0, %s74
      %s92 = sphi 0, %s92
      %s94 = sphi 0, %s92
      %s95 = sphi 0, %s94
      %s109 = sphi 0, %s95
      %s113 = sphi 0, %s113
      %s115 = sphi 0, %s113
      %s116 = sphi 0, %s115
      %s130 = sphi 0, %s116
      %s134 = sphi 0, %s134
      %s136 = sphi 0, %s134
      %s137 = sphi 0, %s136
      %s151 = sphi 0, %s137
      %s155 = sphi 0, %s155
      %s157 = sphi 0, %s155
      %s158 = sphi 0, %s157
      %s172 = sphi 0, %s158
      %s178 = sphi 0, %s180
      %s181 = sphi 0, %s178
      %s182 = sphi 0, %s181
      %s198 = sphi 0, %s182
    $region4: #{tpu_custom_call.1} parent=1 // loop_header_branch
      %19 = sbr.rel (%p17) target = $region8
    $region5: #{tpu_custom_call.1} parent=1 // loop_body
      %s21 = ssub.s32 %s16, 1
      %s22 = ssub.s32 %s16, 2
      %s23 = sadd.s32 %s16, 1
      %s24 = ssub.s32 %s16, %s23
      %p25 = scmp.eq.s32.totalorder %s24, 0
      %s27 = sadd.s32 %s26, 1
      %s28 = scalar_select %p25, %s26, %s27
      %p31 = pneg %p25
      %p32 = scmp.eq.s32.totalorder %s16, 1
      %p33 = por %p31, %p32
      %p34 = scmp.ne.s32.totalorder %s26, %s29
      %p35 = scmp.eq.s32.totalorder %s16, 0
      %p36 = por %p34, %p35
      %p37 = scmp.ne.s32.totalorder %s26, %s29
      %p38 = scmp.eq.s32.totalorder %s21, 1
      %p39 = por %p37, %p38
      %p40 = scmp.ne.s32.totalorder %s29, %s30
      %p41 = scmp.eq.s32.totalorder %s21, 0
      %p42 = por %p40, %p41
      %p43 = scmp.ne.s32.totalorder %s29, %s30
      %p44 = scmp.eq.s32.totalorder %s22, 1
      %p45 = por %p43, %p44
      %p47 = scmp.ne.s32.totalorder %s30, %s46
      %p48 = scmp.eq.s32.totalorder %s22, 0
      %p49 = por %p47, %p48
      %s51 = sadd.s32 %s50, 1
      %p54 = scmp.eq.s32.totalorder %s16, 1
      %p55 = scmp.ne.s32.totalorder %s50, %s52
      %p56 = scmp.eq.s32.totalorder %s16, 0
      %p57 = por %p55, %p56
      %p58 = scmp.ne.s32.totalorder %s50, %s52
      %p59 = scmp.eq.s32.totalorder %s21, 1
      %p60 = por %p58, %p59
      %p61 = scmp.ne.s32.totalorder %s52, %s53
      %p62 = scmp.eq.s32.totalorder %s21, 0
      %p63 = por %p61, %p62
      %p64 = scmp.ne.s32.totalorder %s52, %s53
      %p65 = scmp.eq.s32.totalorder %s22, 1
      %p66 = por %p64, %p65
      %p68 = scmp.ne.s32.totalorder %s53, %s67
      %p69 = scmp.eq.s32.totalorder %s22, 0
      %p70 = por %p68, %p69
      %s72 = sadd.s32 %s71, 1
      %p75 = scmp.eq.s32.totalorder %s16, 1
      %p76 = scmp.ne.s32.totalorder %s71, %s73
      %p77 = scmp.eq.s32.totalorder %s16, 0
      %p78 = por %p76, %p77
      %p79 = scmp.ne.s32.totalorder %s71, %s73
      %p80 = scmp.eq.s32.totalorder %s21, 1
      %p81 = por %p79, %p80
      %p82 = scmp.ne.s32.totalorder %s73, %s74
      %p83 = scmp.eq.s32.totalorder %s21, 0
      %p84 = por %p82, %p83
      %p85 = scmp.ne.s32.totalorder %s73, %s74
      %p86 = scmp.eq.s32.totalorder %s22, 1
      %p87 = por %p85, %p86
      %p89 = scmp.ne.s32.totalorder %s74, %s88
      %p90 = scmp.eq.s32.totalorder %s22, 0
      %p91 = por %p89, %p90
      %s93 = sadd.s32 %s92, 1
      %p96 = scmp.eq.s32.totalorder %s16, 1
      %p97 = scmp.ne.s32.totalorder %s92, %s94
      %p98 = scmp.eq.s32.totalorder %s16, 0
      %p99 = por %p97, %p98
      %p100 = scmp.ne.s32.totalorder %s92, %s94
      %p101 = scmp.eq.s32.totalorder %s21, 1
      %p102 = por %p100, %p101
      %p103 = scmp.ne.s32.totalorder %s94, %s95
      %p104 = scmp.eq.s32.totalorder %s21, 0
      %p105 = por %p103, %p104
      %p106 = scmp.ne.s32.totalorder %s94, %s95
      %p107 = scmp.eq.s32.totalorder %s22, 1
      %p108 = por %p106, %p107
      %p110 = scmp.ne.s32.totalorder %s95, %s109
      %p111 = scmp.eq.s32.totalorder %s22, 0
      %p112 = por %p110, %p111
      %s114 = sadd.s32 %s113, 1
      %p117 = scmp.eq.s32.totalorder %s16, 1
      %p118 = scmp.ne.s32.totalorder %s113, %s115
      %p119 = scmp.eq.s32.totalorder %s16, 0
      %p120 = por %p118, %p119
      %p121 = scmp.ne.s32.totalorder %s113, %s115
      %p122 = scmp.eq.s32.totalorder %s21, 1
      %p123 = por %p121, %p122
      %p124 = scmp.ne.s32.totalorder %s115, %s116
      %p125 = scmp.eq.s32.totalorder %s21, 0
      %p126 = por %p124, %p125
      %p127 = scmp.ne.s32.totalorder %s115, %s116
      %p128 = scmp.eq.s32.totalorder %s22, 1
      %p129 = por %p127, %p128
      %p131 = scmp.ne.s32.totalorder %s116, %s130
      %p132 = scmp.eq.s32.totalorder %s22, 0
      %p133 = por %p131, %p132
      %s135 = sadd.s32 %s134, 1
      %p138 = scmp.eq.s32.totalorder %s16, 1
      %p139 = scmp.ne.s32.totalorder %s134, %s136
      %p140 = scmp.eq.s32.totalorder %s16, 0
      %p141 = por %p139, %p140
      %p142 = scmp.ne.s32.totalorder %s134, %s136
      %p143 = scmp.eq.s32.totalorder %s21, 1
      %p144 = por %p142, %p143
      %p145 = scmp.ne.s32.totalorder %s136, %s137
      %p146 = scmp.eq.s32.totalorder %s21, 0
      %p147 = por %p145, %p146
      %p148 = scmp.ne.s32.totalorder %s136, %s137
      %p149 = scmp.eq.s32.totalorder %s22, 1
      %p150 = por %p148, %p149
      %p152 = scmp.ne.s32.totalorder %s137, %s151
      %p153 = scmp.eq.s32.totalorder %s22, 0
      %p154 = por %p152, %p153
      %s156 = sadd.s32 %s155, 1
      %p159 = scmp.eq.s32.totalorder %s16, 1
      %p160 = scmp.ne.s32.totalorder %s155, %s157
      %p161 = scmp.eq.s32.totalorder %s16, 0
      %p162 = por %p160, %p161
      %p163 = scmp.ne.s32.totalorder %s155, %s157
      %p164 = scmp.eq.s32.totalorder %s21, 1
      %p165 = por %p163, %p164
      %p166 = scmp.ne.s32.totalorder %s157, %s158
      %p167 = scmp.eq.s32.totalorder %s21, 0
      %p168 = por %p166, %p167
      %p169 = scmp.ne.s32.totalorder %s157, %s158
      %p170 = scmp.eq.s32.totalorder %s22, 1
      %p171 = por %p169, %p170
      %p173 = scmp.ne.s32.totalorder %s158, %s172
      %p174 = scmp.eq.s32.totalorder %s22, 0
      %p175 = por %p173, %p174
      %s176 = ssub.s32 %s16, %s23
      %p177 = scmp.eq.s32.totalorder %s176, 0
      %s179 = sadd.s32 %s178, 1
      %s180 = scalar_select %p177, %s178, %s179
      %p183 = pneg %p177
      %p184 = scmp.eq.s32.totalorder %s16, 1
      %p185 = por %p183, %p184
      %p186 = scmp.ne.s32.totalorder %s178, %s181
      %p187 = scmp.eq.s32.totalorder %s16, 0
      %p188 = por %p186, %p187
      %p189 = scmp.ne.s32.totalorder %s178, %s181
      %p190 = scmp.eq.s32.totalorder %s21, 1
      %p191 = por %p189, %p190
      %p192 = scmp.ne.s32.totalorder %s181, %s182
      %p193 = scmp.eq.s32.totalorder %s21, 0
      %p194 = por %p192, %p193
      %p195 = scmp.ne.s32.totalorder %s181, %s182
      %p196 = scmp.eq.s32.totalorder %s22, 1
      %p197 = por %p195, %p196
      %p199 = scmp.ne.s32.totalorder %s182, %s198
      %p200 = scmp.eq.s32.totalorder %s22, 0
      %p201 = por %p199, %p200
      %p202 = scmp.le.s32.totalorder 1, %s16
      %p203 = scmp.lt.s32.totalorder %s16, 3
      %p204 = pnand %p202, %p203
      %p205 = pneg %p204
      // Predicated region
      $region9: #{tpu_custom_call.1} parent=5 // pred_check
        _
      $region10: #{tpu_custom_call.1} parent=5 // pred_check_branch
        %207 = sbr.rel (%p204) target = $region12
      $region11: #{tpu_custom_call.1} parent=5 // pred_region
        %s208 = ssub.s32 %s16, 1
        // Predicated region
        $region13: #{tpu_custom_call.1} parent=11 // pred_check
          %p209 = pneg %p63
        $region14: #{tpu_custom_call.1} parent=11 // pred_check_branch
          %211 = sbr.rel (%p209) target = $region16
        $region15: #{tpu_custom_call.1} parent=11 // pred_region
          _
        $region16: #{tpu_custom_call.1} parent=11 // pred_fallthru
          _
        // Predicated region
        $region17: #{tpu_custom_call.1} parent=11 // pred_check
          %p212 = pneg %p84
        $region18: #{tpu_custom_call.1} parent=11 // pred_check_branch
          %214 = sbr.rel (%p212) target = $region20
        $region19: #{tpu_custom_call.1} parent=11 // pred_region
          _
        $region20: #{tpu_custom_call.1} parent=11 // pred_fallthru
          _
        // Predicated region
        $region21: #{tpu_custom_call.1} parent=11 // pred_check
          %p215 = pneg %p105
        $region22: #{tpu_custom_call.1} parent=11 // pred_check_branch
          %217 = sbr.rel (%p215) target = $region24
        $region23: #{tpu_custom_call.1} parent=11 // pred_region
          _
        $region24: #{tpu_custom_call.1} parent=11 // pred_fallthru
          _
        // Predicated region
        $region25: #{tpu_custom_call.1} parent=11 // pred_check
          %p218 = pneg %p126
        $region26: #{tpu_custom_call.1} parent=11 // pred_check_branch
          %220 = sbr.rel (%p218) target = $region28
        $region27: #{tpu_custom_call.1} parent=11 // pred_region
          _
        $region28: #{tpu_custom_call.1} parent=11 // pred_fallthru
          _
        // Predicated region
        $region29: #{tpu_custom_call.1} parent=11 // pred_check
          %p221 = pneg %p147
        $region30: #{tpu_custom_call.1} parent=11 // pred_check_branch
          %223 = sbr.rel (%p221) target = $region32
        $region31: #{tpu_custom_call.1} parent=11 // pred_region
          _
        $region32: #{tpu_custom_call.1} parent=11 // pred_fallthru
          _
        // Predicated region
        $region33: #{tpu_custom_call.1} parent=11 // pred_check
          %p224 = pneg %p168
        $region34: #{tpu_custom_call.1} parent=11 // pred_check_branch
          %226 = sbr.rel (%p224) target = $region36
        $region35: #{tpu_custom_call.1} parent=11 // pred_region
          _
        $region36: #{tpu_custom_call.1} parent=11 // pred_fallthru
          _
      $region12: #{tpu_custom_call.1} parent=5 // pred_fallthru
        _
      %p227 = scmp.lt.s32.totalorder %s16, 2
      // Predicated region
      $region37: #{tpu_custom_call.1} parent=5 // pred_check
        %p228 = pneg %p227
      $region38: #{tpu_custom_call.1} parent=5 // pred_check_branch
        %230 = sbr.rel (%p228) target = $region40
      $region39: #{tpu_custom_call.1} parent=5 // pred_region
        // Predicated region
        $region41: #{tpu_custom_call.1} parent=39 // pred_check
          %p231 = pneg %p36
        $region42: #{tpu_custom_call.1} parent=39 // pred_check_branch
          %233 = sbr.rel (%p231) target = $region44
        $region43: #{tpu_custom_call.1} parent=39 // pred_region
          %s234 = smul.u32 8, %s16
          %p235 = scmp.lt.s32.totalorder %s234, 15
          %s236 = scalar_select %p235, %s234, 15
          %s237 = smul.addr %s236, 8
          %s238 = scalar_lea.vmem %s0, %s237
          %s239 = smul.u32 8, %s16
        $region44: #{tpu_custom_call.1} parent=39 // pred_fallthru
          _
      $region40: #{tpu_custom_call.1} parent=5 // pred_fallthru
        _
      %p240 = scmp.le.s32.totalorder 1, %s16
      %p241 = scmp.lt.s32.totalorder %s16, 3
      %p242 = pnand %p240, %p241
      %p243 = pneg %p242
      // Predicated region
      $region45: #{tpu_custom_call.1} parent=5 // pred_check
        _
      $region46: #{tpu_custom_call.1} parent=5 // pred_check_branch
        %245 = sbr.rel (%p242) target = $region48
      $region47: #{tpu_custom_call.1} parent=5 // pred_region
        %s246 = ssub.s32 %s16, 1
        %s247 = smul.u32 8, %s21
        %p248 = scmp.lt.s32.totalorder %s247, 15
        %s249 = scalar_select %p248, %s247, 15
        %s250 = smul.addr %s249, 8
        %s251 = scalar_lea.vmem %s0, %s250
        %p252 = pneg %p42
        %p253 = pneg %p39
        %p254 = pneg %p63
        %p255 = pneg %p60
        %p256 = pneg %p84
        %p257 = pneg %p81
        %p258 = pneg %p105
        %p259 = pneg %p102
        %p260 = pneg %p126
        %p261 = pneg %p123
        %p262 = pneg %p147
        %p263 = pneg %p144
        %p264 = pneg %p168
        %p265 = pneg %p165
        %p266 = pneg %p194
        %p267 = pneg %p191
        %s268 = sand.u32 %s181, 1
        %s269 = scalar_lea.sflag [#allocation3], %s268
        %s270 = sand.u32 %s181, 1
        %s271 = smul.addr %s270, 8
        %s272 = scalar_lea.vmem [#allocation2], %s271
        %s273 = smul.u32 8, %s21
        %p274 = scmp.lt.s32.totalorder %s273, 15
        %s275 = scalar_select %p274, %s273, 15
        %s276 = smul.addr %s275, 8
        %s277 = scalar_lea.vmem %s0, %s276
        %s278 = smul.u32 8, %s21
        %v281 = vld [vmem:[%s277] sm:$0xff]
        %v282 = vld [vmem:[%s277 + $0x8] sm:$0xff]
        %v283 = vld [vmem:[%s277 + $0x10] sm:$0xff]
        %v284 = vld [vmem:[%s277 + $0x18] sm:$0xff]
        %v285 = vld [vmem:[%s277 + $0x20] sm:$0xff]
        %v286 = vld [vmem:[%s277 + $0x28] sm:$0xff]
        %v287 = vld [vmem:[%s277 + $0x30] sm:$0xff]
        %v288 = vld [vmem:[%s277 + $0x38] sm:$0xff]
        %v289 = vpack.c.bf16 %v282, %v281
        %v290 = vpack.c.bf16 %v284, %v283
        %v291 = vpack.c.bf16 %v286, %v285
        %v292 = vpack.c.bf16 %v288, %v287
        %v293 = vlaneseq
        %v294 = vshrl.u32 %v293, 7
        %v295 = vadd.s32 %v294, 8
        %v296 = vadd.s32 %v294, 16
        %v297 = vadd.s32 %v294, 24
        %v298 = vadd.s32 %v294, 32
        %v299 = vadd.s32 %v294, 40
        %v300 = vadd.s32 %v294, 48
        %v301 = vadd.s32 %v294, 56
        %vm302 = vcmp.lt.s32.totalorder %v294, 0
        %v303 = vsub.s32 0, %v294
        %v304 = vsel %vm302, %v303, %v294
        %v305 = vshrl.u32 %v304, 3
        %v306 = vand.u32 %v304, 7
        %v307 = vsub.s32 0, %v306
        %v308 = vsel %vm302, %v307, %v306
        %vm309 = vcmp.lt.s32.totalorder %v295, 0
        %v310 = vsub.s32 0, %v295
        %v311 = vsel %vm309, %v310, %v295
        %v312 = vshrl.u32 %v311, 3
        %v313 = vand.u32 %v311, 7
        %v314 = vsub.s32 0, %v313
        %v315 = vsel %vm309, %v314, %v313
        %vm316 = vcmp.lt.s32.totalorder %v296, 0
        %v317 = vsub.s32 0, %v296
        %v318 = vsel %vm316, %v317, %v296
        %v319 = vshrl.u32 %v318, 3
        %v320 = vand.u32 %v318, 7
        %v321 = vsub.s32 0, %v320
        %v322 = vsel %vm316, %v321, %v320
        %vm323 = vcmp.lt.s32.totalorder %v297, 0
        %v324 = vsub.s32 0, %v297
        %v325 = vsel %vm323, %v324, %v297
        %v326 = vshrl.u32 %v325, 3
        %v327 = vand.u32 %v325, 7
        %v328 = vsub.s32 0, %v327
        %v329 = vsel %vm323, %v328, %v327
        %vm330 = vcmp.lt.s32.totalorder %v298, 0
        %v331 = vsub.s32 0, %v298
        %v332 = vsel %vm330, %v331, %v298
        %v333 = vshrl.u32 %v332, 3
        %v334 = vand.u32 %v332, 7
        %v335 = vsub.s32 0, %v334
        %v336 = vsel %vm330, %v335, %v334
        %vm337 = vcmp.lt.s32.totalorder %v299, 0
        %v338 = vsub.s32 0, %v299
        %v339 = vsel %vm337, %v338, %v299
        %v340 = vshrl.u32 %v339, 3
        %v341 = vand.u32 %v339, 7
        %v342 = vsub.s32 0, %v341
        %v343 = vsel %vm337, %v342, %v341
        %vm344 = vcmp.lt.s32.totalorder %v300, 0
        %v345 = vsub.s32 0, %v300
        %v346 = vsel %vm344, %v345, %v300
        %v347 = vshrl.u32 %v346, 3
        %v348 = vand.u32 %v346, 7
        %v349 = vsub.s32 0, %v348
        %v350 = vsel %vm344, %v349, %v348
        %vm351 = vcmp.lt.s32.totalorder %v301, 0
        %v352 = vsub.s32 0, %v301
        %v353 = vsel %vm351, %v352, %v301
        %v354 = vshrl.u32 %v353, 3
        %v355 = vand.u32 %v353, 7
        %v356 = vsub.s32 0, %v355
        %v357 = vsel %vm351, %v356, %v355
        %vm358 = vcmp.ne.s32.totalorder %v308, 0
        %vm359 = vcmp.ne.s32.totalorder %v315, 0
        %vm360 = vcmp.ne.s32.totalorder %v322, 0
        %vm361 = vcmp.ne.s32.totalorder %v329, 0
        %vm362 = vcmp.ne.s32.totalorder %v336, 0
        %vm363 = vcmp.ne.s32.totalorder %v343, 0
        %vm364 = vcmp.ne.s32.totalorder %v350, 0
        %vm365 = vcmp.ne.s32.totalorder %v357, 0
        %vm366 = vcmp.lt.s32.totalorder %v308, 0
        %vm367 = vcmp.lt.s32.totalorder %v315, 0
        %vm368 = vcmp.lt.s32.totalorder %v322, 0
        %vm369 = vcmp.lt.s32.totalorder %v329, 0
        %vm370 = vcmp.lt.s32.totalorder %v336, 0
        %vm371 = vcmp.lt.s32.totalorder %v343, 0
        %vm372 = vcmp.lt.s32.totalorder %v350, 0
        %vm373 = vcmp.lt.s32.totalorder %v357, 0
        %vm374 = vmand %vm366, %vm358
        %vm375 = vmand %vm367, %vm359
        %vm376 = vmand %vm368, %vm360
        %vm377 = vmand %vm369, %vm361
        %vm378 = vmand %vm370, %vm362
        %vm379 = vmand %vm371, %vm363
        %vm380 = vmand %vm372, %vm364
        %vm381 = vmand %vm373, %vm365
        %v382 = vadd.s32 %v308, 8
        %v383 = vadd.s32 %v315, 8
        %v384 = vadd.s32 %v322, 8
        %v385 = vadd.s32 %v329, 8
        %v386 = vadd.s32 %v336, 8
        %v387 = vadd.s32 %v343, 8
        %v388 = vadd.s32 %v350, 8
        %v389 = vadd.s32 %v357, 8
        %v390 = vsel %vm374, %v382, %v308
        %v391 = vsel %vm375, %v383, %v315
        %v392 = vsel %vm376, %v384, %v322
        %v393 = vsel %vm377, %v385, %v329
        %v394 = vsel %vm378, %v386, %v336
        %v395 = vsel %vm379, %v387, %v343
        %v396 = vsel %vm380, %v388, %v350
        %v397 = vsel %vm381, %v389, %v357
        %v398 = vld [vmem:[%s1] sm:$0xff]
        %v399 = vld [vmem:[%s1 + $0x8] sm:$0xf]
        %v400 = vld [vmem:[%s1 + $0xc] sm:$0xff]
        %v401 = vld [vmem:[%s1 + $0x14] sm:$0xf]
        %v402 = vld [vmem:[%s1 + $0x18] sm:$0xff]
        %v403 = vld [vmem:[%s1 + $0x20] sm:$0xf]
        %v404 = vld [vmem:[%s1 + $0x24] sm:$0xff]
        %v405 = vld [vmem:[%s1 + $0x2c] sm:$0xf]
        %v414 = vunpack.c.l.b16 %v398
        %v415 = vunpack.c.h.b16 %v398
        %v416 = vunpack.c.l.b16 %v399
        %v417 = vunpack.c.l.b16 %v400
        %v418 = vunpack.c.h.b16 %v400
        %v419 = vunpack.c.l.b16 %v401
        %v420 = vunpack.c.l.b16 %v402
        %v421 = vunpack.c.h.b16 %v402
        %v422 = vunpack.c.l.b16 %v403
        %v423 = vunpack.c.l.b16 %v404
        %v424 = vunpack.c.h.b16 %v404
        %v425 = vunpack.c.l.b16 %v405
        %v426 = vpack.c.b16 %v417, %v414
        %v427 = vpack.c.b16 %v418, %v415
        %v428 = vpack.c.b16 %v419, %v416
        %v429 = vpack.c.b16 %v423, %v420
        %v430 = vpack.c.b16 %v424, %v421
        %v431 = vpack.c.b16 %v425, %v422
        %vm438 = vcmask 261120
        %v440 = vsel %vm438, %v289, 0
        %v443 = vsel %vm438, %v290, 0
        %v446 = vsel %vm438, %v291, 0
        %v449 = vsel %vm438, %v292, 0
        %451 = vmatprep.subr.bf16.mxu0 %v427
        %452 = vmatpush1.bf16.msra.mxu0 %v426
        %453 = vmatprep.subr.bf16.mxu0 %v430
        %454 = vmatpush1.bf16.msra.mxu0 %v429
        %455 = vmatprep.subr.bf16.mxu0 0
        %456 = vmatpush1.bf16.msra.mxu0 0
        %457 = vmatprep.subr.bf16.mxu0 0
        %458 = vmatpush1.bf16.msra.mxu0 0
        %459 = vmatprep.subr.bf16.mxu0 0
        %460 = vmatpush1.bf16.msra.mxu0 0
        %461 = vmatprep.subr.bf16.mxu0 0
        %462 = vmatpush1.bf16.msra.mxu0 0
        %463 = vmatprep.subr.bf16.mxu0 0
        %464 = vmatpush1.bf16.msra.mxu0 0
        %465 = vmatprep.subr.bf16.mxu0 0
        %466 = vmatpush1.bf16.msra.mxu0 0
        %467 = vmatprep.subr.bf16.mxu0 0
        %468 = vmatpush1.bf16.msra.mxu0 0
        %469 = vmatprep.subr.bf16.mxu0 0
        %470 = vmatpush1.bf16.msra.mxu0 0
        %471 = vmatprep.subr.bf16.mxu0 0
        %472 = vmatpush1.bf16.msra.mxu0 0
        %473 = vmatprep.subr.bf16.mxu0 0
        %474 = vmatpush1.bf16.msra.mxu0 0
        %475 = vmatprep.subr.bf16.mxu0 0
        %476 = vmatpush1.bf16.msra.mxu0 0
        %477 = vmatprep.subr.bf16.mxu0 0
        %478 = vmatpush1.bf16.msra.mxu0 0
        %479 = vmatprep.subr.bf16.mxu0 0
        %480 = vmatpush1.bf16.msra.mxu0 0
        %481 = vmatprep.subr.bf16.mxu0 0
        %482 = vmatpush1.bf16.msra.mxu0 0
        %483 = vmatprep.mubr.bf16.mxu0 0
        %484 = vmatmul.mubr.bf16.gmra.mrb[0].mxu0 %v440
        %v485 = vpop.f32.mrb[0].mxu0
        %v486 = vadd.f32 0.0, %v485
        %v487 = vpop.f32.mrb[0].mxu0
        %v488 = vadd.f32 0.0, %v487
        %v489 = vpop.f32.mrb[0].mxu0
        %v490 = vadd.f32 0.0, %v489
        %v491 = vpop.f32.mrb[0].mxu0
        %v492 = vadd.f32 0.0, %v491
        %493 = vmatprep.mubr.bf16.mxu0 0
        %494 = vmatmul.mubr.bf16.gmra.mrb[0].mxu0 %v443
        %v495 = vpop.f32.mrb[0].mxu0
        %v496 = vadd.f32 0.0, %v495
        %v497 = vpop.f32.mrb[0].mxu0
        %v498 = vadd.f32 0.0, %v497
        %v499 = vpop.f32.mrb[0].mxu0
        %v500 = vadd.f32 0.0, %v499
        %v501 = vpop.f32.mrb[0].mxu0
        %v502 = vadd.f32 0.0, %v501
        %503 = vmatprep.mubr.bf16.mxu0 0
        %504 = vmatmul.mubr.bf16.gmra.mrb[0].mxu0 %v446
        %v505 = vpop.f32.mrb[0].mxu0
        %v506 = vadd.f32 0.0, %v505
        %v507 = vpop.f32.mrb[0].mxu0
        %v508 = vadd.f32 0.0, %v507
        %v509 = vpop.f32.mrb[0].mxu0
        %v510 = vadd.f32 0.0, %v509
        %v511 = vpop.f32.mrb[0].mxu0
        %v512 = vadd.f32 0.0, %v511
        %513 = vmatprep.mubr.bf16.mxu0 0
        %514 = vmatmul.mubr.bf16.gmra.mrb[0].mxu0 %v449
        %v515 = vpop.f32.mrb[0].mxu0
        %v516 = vadd.f32 0.0, %v515
        %v517 = vpop.f32.mrb[0].mxu0
        %v518 = vadd.f32 0.0, %v517
        %v519 = vpop.f32.mrb[0].mxu0
        %v520 = vadd.f32 0.0, %v519
        %v521 = vpop.f32.mrb[0].mxu0
        %v522 = vadd.f32 0.0, %v521
        %523 = vdwg.mxu0
        %524 = vmatprep.subr.bf16.mxu0 0
        %525 = vmatpush1.bf16.msra.mxu0 %v428
        %526 = vmatprep.subr.bf16.mxu0 0
        %527 = vmatpush1.bf16.msra.mxu0 %v431
        %528 = vmatprep.subr.bf16.mxu0 0
        %529 = vmatpush1.bf16.msra.mxu0 0
        %530 = vmatprep.subr.bf16.mxu0 0
        %531 = vmatpush1.bf16.msra.mxu0 0
        %532 = vmatprep.subr.bf16.mxu0 0
        %533 = vmatpush1.bf16.msra.mxu0 0
        %534 = vmatprep.subr.bf16.mxu0 0
        %535 = vmatpush1.bf16.msra.mxu0 0
        %536 = vmatprep.subr.bf16.mxu0 0
        %537 = vmatpush1.bf16.msra.mxu0 0
        %538 = vmatprep.subr.bf16.mxu0 0
        %539 = vmatpush1.bf16.msra.mxu0 0
        %540 = vmatprep.subr.bf16.mxu0 0
        %541 = vmatpush1.bf16.msra.mxu0 0
        %542 = vmatprep.subr.bf16.mxu0 0
        %543 = vmatpush1.bf16.msra.mxu0 0
        %544 = vmatprep.subr.bf16.mxu0 0
        %545 = vmatpush1.bf16.msra.mxu0 0
        %546 = vmatprep.subr.bf16.mxu0 0
        %547 = vmatpush1.bf16.msra.mxu0 0
        %548 = vmatprep.subr.bf16.mxu0 0
        %549 = vmatpush1.bf16.msra.mxu0 0
        %550 = vmatprep.subr.bf16.mxu0 0
        %551 = vmatpush1.bf16.msra.mxu0 0
        %552 = vmatprep.subr.bf16.mxu0 0
        %553 = vmatpush1.bf16.msra.mxu0 0
        %554 = vmatprep.subr.bf16.mxu0 0
        %555 = vmatpush1.bf16.msra.mxu0 0
        %556 = vmatprep.mubr.bf16.mxu0 0
        %557 = vmatmul.mubr.bf16.gmra.mrb[0].mxu0 %v440
        %v558 = vpop.f32.mrb[0].mxu0
        %v559 = vadd.f32 0.0, %v558
        %v560 = vpop.f32.mrb[0].mxu0
        %v561 = vpop.f32.mrb[0].mxu0
        %v562 = vadd.f32 0.0, %v561
        %v563 = vpop.f32.mrb[0].mxu0
        %564 = vmatprep.mubr.bf16.mxu0 0
        %565 = vmatmul.mubr.bf16.gmra.mrb[0].mxu0 %v443
        %v566 = vpop.f32.mrb[0].mxu0
        %v567 = vadd.f32 0.0, %v566
        %v568 = vpop.f32.mrb[0].mxu0
        %v569 = vpop.f32.mrb[0].mxu0
        %v570 = vadd.f32 0.0, %v569
        %v571 = vpop.f32.mrb[0].mxu0
        %572 = vmatprep.mubr.bf16.mxu0 0
        %573 = vmatmul.mubr.bf16.gmra.mrb[0].mxu0 %v446
        %v574 = vpop.f32.mrb[0].mxu0
        %v575 = vadd.f32 0.0, %v574
        %v576 = vpop.f32.mrb[0].mxu0
        %v577 = vpop.f32.mrb[0].mxu0
        %v578 = vadd.f32 0.0, %v577
        %v579 = vpop.f32.mrb[0].mxu0
        %580 = vmatprep.mubr.bf16.mxu0 0
        %581 = vmatmul.mubr.bf16.gmra.mrb[0].mxu0 %v449
        %v582 = vpop.f32.mrb[0].mxu0
        %v583 = vadd.f32 0.0, %v582
        %v584 = vpop.f32.mrb[0].mxu0
        %v585 = vpop.f32.mrb[0].mxu0
        %v586 = vadd.f32 0.0, %v585
        %v587 = vpop.f32.mrb[0].mxu0
        %588 = vdwg.mxu0
        %vm589 = vcmp.ge.s32.totalorder %v390, 1
        %vm590 = vcmp.ge.s32.totalorder %v391, 1
        %vm591 = vcmp.ge.s32.totalorder %v392, 1
        %vm592 = vcmp.ge.s32.totalorder %v393, 1
        %vm593 = vcmp.ge.s32.totalorder %v394, 1
        %vm594 = vcmp.ge.s32.totalorder %v395, 1
        %vm595 = vcmp.ge.s32.totalorder %v396, 1
        %vm596 = vcmp.ge.s32.totalorder %v397, 1
        %v597 = vrot.slane %v486, 7
        %v598 = vrot.slane %v490, 7
        %v599 = vrot.slane %v496, 7
        %v600 = vrot.slane %v500, 7
        %v601 = vrot.slane %v506, 7
        %v602 = vrot.slane %v510, 7
        %v603 = vrot.slane %v516, 7
        %v604 = vrot.slane %v520, 7
        %vm605 = vcmp.lt.s32.totalorder %v294, 1
        %v606 = vsel %vm605, %v603, %v604
        %v607 = vsel %vm605, %v602, %v603
        %v608 = vsel %vm605, %v601, %v602
        %v609 = vsel %vm605, %v600, %v601
        %v610 = vsel %vm605, %v599, %v600
        %v611 = vsel %vm605, %v598, %v599
        %v612 = vsel %vm605, %v597, %v598
        %v613 = vsel %vm605, %v604, %v597
        %v614 = vsel %vm589, 1, 0
        %v615 = vsel %vm590, 1, 0
        %v616 = vsel %vm591, 1, 0
        %v617 = vsel %vm592, 1, 0
        %v618 = vsel %vm593, 1, 0
        %v619 = vsel %vm594, 1, 0
        %v620 = vsel %vm595, 1, 0
        %v621 = vsel %vm596, 1, 0
        %vm622 = vcmp.eq.s32.totalorder %v614, 1
        %vm623 = vcmp.eq.s32.totalorder %v615, 1
        %vm624 = vcmp.eq.s32.totalorder %v616, 1
        %vm625 = vcmp.eq.s32.totalorder %v617, 1
        %vm626 = vcmp.eq.s32.totalorder %v618, 1
        %vm627 = vcmp.eq.s32.totalorder %v619, 1
        %vm628 = vcmp.eq.s32.totalorder %v620, 1
        %vm629 = vcmp.eq.s32.totalorder %v621, 1
        %v630 = vsel %vm622, %v613, 0.0
        %v631 = vsel %vm623, %v612, 0.0
        %v632 = vsel %vm624, %v611, 0.0
        %v633 = vsel %vm625, %v610, 0.0
        %v634 = vsel %vm626, %v609, 0.0
        %v635 = vsel %vm627, %v608, 0.0
        %v636 = vsel %vm628, %v607, 0.0
        %v637 = vsel %vm629, %v606, 0.0
        %v638 = vadd.f32 %v488, %v630
        %v639 = vadd.f32 %v492, %v631
        %v640 = vadd.f32 %v498, %v632
        %v641 = vadd.f32 %v502, %v633
        %v642 = vadd.f32 %v508, %v634
        %v643 = vadd.f32 %v512, %v635
        %v644 = vadd.f32 %v518, %v636
        %v645 = vadd.f32 %v522, %v637
        %vm646 = vcmp.le.s32.totalorder %v390, 6
        %vm647 = vcmp.le.s32.totalorder %v391, 6
        %vm648 = vcmp.le.s32.totalorder %v392, 6
        %vm649 = vcmp.le.s32.totalorder %v393, 6
        %vm650 = vcmp.le.s32.totalorder %v394, 6
        %vm651 = vcmp.le.s32.totalorder %v395, 6
        %vm652 = vcmp.le.s32.totalorder %v396, 6
        %vm653 = vcmp.le.s32.totalorder %v397, 6
        %v654 = vrot.slane %v559, 1
        %v655 = vrot.slane %v562, 1
        %v656 = vrot.slane %v567, 1
        %v657 = vrot.slane %v570, 1
        %v658 = vrot.slane %v575, 1
        %v659 = vrot.slane %v578, 1
        %v660 = vrot.slane %v583, 1
        %v661 = vrot.slane %v586, 1
        %vm662 = vcmp.lt.s32.totalorder %v294, 7
        %v663 = vsel %vm662, %v660, %v661
        %v664 = vsel %vm662, %v659, %v660
        %v665 = vsel %vm662, %v658, %v659
        %v666 = vsel %vm662, %v657, %v658
        %v667 = vsel %vm662, %v656, %v657
        %v668 = vsel %vm662, %v655, %v656
        %v669 = vsel %vm662, %v654, %v655
        %v670 = vsel %vm662, %v661, %v654
        %v671 = vsel %vm646, 1, 0
        %v672 = vsel %vm647, 1, 0
        %v673 = vsel %vm648, 1, 0
        %v674 = vsel %vm649, 1, 0
        %v675 = vsel %vm650, 1, 0
        %v676 = vsel %vm651, 1, 0
        %v677 = vsel %vm652, 1, 0
        %v678 = vsel %vm653, 1, 0
        %vm679 = vcmp.eq.s32.totalorder %v671, 1
        %vm680 = vcmp.eq.s32.totalorder %v672, 1
        %vm681 = vcmp.eq.s32.totalorder %v673, 1
        %vm682 = vcmp.eq.s32.totalorder %v674, 1
        %vm683 = vcmp.eq.s32.totalorder %v675, 1
        %vm684 = vcmp.eq.s32.totalorder %v676, 1
        %vm685 = vcmp.eq.s32.totalorder %v677, 1
        %vm686 = vcmp.eq.s32.totalorder %v678, 1
        %v687 = vsel %vm679, %v669, 0.0
        %v688 = vsel %vm680, %v668, 0.0
        %v689 = vsel %vm681, %v667, 0.0
        %v690 = vsel %vm682, %v666, 0.0
        %v691 = vsel %vm683, %v665, 0.0
        %v692 = vsel %vm684, %v664, 0.0
        %v693 = vsel %vm685, %v663, 0.0
        %v694 = vsel %vm686, %v670, 0.0
        %v695 = vadd.f32 %v638, %v687
        %v696 = vadd.f32 %v639, %v688
        %v697 = vadd.f32 %v640, %v689
        %v698 = vadd.f32 %v641, %v690
        %v699 = vadd.f32 %v642, %v691
        %v700 = vadd.f32 %v643, %v692
        %v701 = vadd.f32 %v644, %v693
        %v702 = vadd.f32 %v645, %v694
        %v703 = vld [vmem:[%s2] sm:$0x1]
        %v705 = vlaneseq
        %v706 = vshrl.u32 %v705, 7
        %v707 = vsub.s32 0, %v706
        %v708 = vrot.slane %v703, %v707
        %v710 = vadd.f32 %v695, %v708
        %v711 = vadd.f32 %v696, %v708
        %v712 = vadd.f32 %v697, %v708
        %v713 = vadd.f32 %v698, %v708
        %v714 = vadd.f32 %v699, %v708
        %v715 = vadd.f32 %v700, %v708
        %v716 = vadd.f32 %v701, %v708
        %v717 = vadd.f32 %v702, %v708
        %v718 = vmax.f32 %v710, 0.0
        %v719 = vmax.f32 %v711, 0.0
        %v720 = vmax.f32 %v712, 0.0
        %v721 = vmax.f32 %v713, 0.0
        %v722 = vmax.f32 %v714, 0.0
        %v723 = vmax.f32 %v715, 0.0
        %v724 = vmax.f32 %v716, 0.0
        %v725 = vmax.f32 %v717, 0.0
        %v726 = vrot.slane %v718, 1
        %v727 = vrot.slane %v719, 1
        %v728 = vrot.slane %v720, 1
        %v729 = vrot.slane %v721, 1
        %v730 = vrot.slane %v722, 1
        %v731 = vrot.slane %v723, 1
        %v732 = vrot.slane %v724, 1
        %v733 = vrot.slane %v725, 1
        %v734 = vsel %vm662, %v732, %v733
        %v735 = vsel %vm662, %v731, %v732
        %v736 = vsel %vm662, %v730, %v731
        %v737 = vsel %vm662, %v729, %v730
        %v738 = vsel %vm662, %v728, %v729
        %v739 = vsel %vm662, %v727, %v728
        %v740 = vsel %vm662, %v726, %v727
        %v741 = vsel %vm662, %v733, %v726
        %v742 = vmax.f32 %v718, %v740
        %v743 = vmax.f32 %v719, %v739
        %v744 = vmax.f32 %v720, %v738
        %v745 = vmax.f32 %v721, %v737
        %v746 = vmax.f32 %v722, %v736
        %v747 = vmax.f32 %v723, %v735
        %v748 = vmax.f32 %v724, %v734
        %v749 = vmax.f32 %v725, %v741
        %v750 = vpack.c.bf16 %v743, %v742
        %v751 = vpack.c.bf16 %v745, %v744
        %v752 = vpack.c.bf16 %v747, %v746
        %v753 = vpack.c.bf16 %v749, %v748
        %v754 = vld [vmem:[%s3] sm:$0xff]
        %v755 = vld [vmem:[%s3 + $0x8] sm:$0xf]
        %v756 = vld [vmem:[%s3 + $0xc] sm:$0xff]
        %v757 = vld [vmem:[%s3 + $0x14] sm:$0xf]
        %v758 = vld [vmem:[%s3 + $0x18] sm:$0xff]
        %v759 = vld [vmem:[%s3 + $0x20] sm:$0xf]
        %v760 = vld [vmem:[%s3 + $0x24] sm:$0xff]
        %v761 = vld [vmem:[%s3 + $0x2c] sm:$0xf]
        %v762 = vld [vmem:[%s3 + $0x30] sm:$0xff]
        %v763 = vld [vmem:[%s3 + $0x38] sm:$0xf]
        %v764 = vld [vmem:[%s3 + $0x3c] sm:$0xff]
        %v765 = vld [vmem:[%s3 + $0x44] sm:$0xf]
        %v766 = vld [vmem:[%s3 + $0x48] sm:$0xff]
        %v767 = vld [vmem:[%s3 + $0x50] sm:$0xf]
        %v768 = vld [vmem:[%s3 + $0x54] sm:$0xff]
        %v769 = vld [vmem:[%s3 + $0x5c] sm:$0xf]
        %v770 = vld [vmem:[%s3 + $0x60] sm:$0xff]
        %v771 = vld [vmem:[%s3 + $0x68] sm:$0xf]
        %v772 = vld [vmem:[%s3 + $0x6c] sm:$0xff]
        %v773 = vld [vmem:[%s3 + $0x74] sm:$0xf]
        %v774 = vld [vmem:[%s3 + $0x78] sm:$0xff]
        %v775 = vld [vmem:[%s3 + $0x80] sm:$0xf]
        %v776 = vld [vmem:[%s3 + $0x84] sm:$0xff]
        %v777 = vld [vmem:[%s3 + $0x8c] sm:$0xf]
        %v778 = vld [vmem:[%s3 + $0x90] sm:$0xff]
        %v779 = vld [vmem:[%s3 + $0x98] sm:$0xf]
        %v780 = vld [vmem:[%s3 + $0x9c] sm:$0xff]
        %v781 = vld [vmem:[%s3 + $0xa4] sm:$0xf]
        %v782 = vld [vmem:[%s3 + $0xa8] sm:$0xff]
        %v783 = vld [vmem:[%s3 + $0xb0] sm:$0xf]
        %v784 = vld [vmem:[%s3 + $0xb4] sm:$0xff]
        %v785 = vld [vmem:[%s3 + $0xbc] sm:$0xf]
        %v818 = vunpack.c.l.b16 %v754
        %v819 = vunpack.c.h.b16 %v754
        %v820 = vunpack.c.l.b16 %v755
        %v821 = vunpack.c.l.b16 %v756
        %v822 = vunpack.c.h.b16 %v756
        %v823 = vunpack.c.l.b16 %v757
        %v824 = vunpack.c.l.b16 %v758
        %v825 = vunpack.c.h.b16 %v758
        %v826 = vunpack.c.l.b16 %v759
        %v827 = vunpack.c.l.b16 %v760
        %v828 = vunpack.c.h.b16 %v760
        %v829 = vunpack.c.l.b16 %v761
        %v830 = vunpack.c.l.b16 %v762
        %v831 = vunpack.c.h.b16 %v762
        %v832 = vunpack.c.l.b16 %v763
        %v833 = vunpack.c.l.b16 %v764
        %v834 = vunpack.c.h.b16 %v764
        %v835 = vunpack.c.l.b16 %v765
        %v836 = vunpack.c.l.b16 %v766
        %v837 = vunpack.c.h.b16 %v766
        %v838 = vunpack.c.l.b16 %v767
        %v839 = vunpack.c.l.b16 %v768
        %v840 = vunpack.c.h.b16 %v768
        %v841 = vunpack.c.l.b16 %v769
        %v842 = vunpack.c.l.b16 %v770
        %v843 = vunpack.c.h.b16 %v770
        %v844 = vunpack.c.l.b16 %v771
        %v845 = vunpack.c.l.b16 %v772
        %v846 = vunpack.c.h.b16 %v772
        %v847 = vunpack.c.l.b16 %v773
        %v848 = vunpack.c.l.b16 %v774
        %v849 = vunpack.c.h.b16 %v774
        %v850 = vunpack.c.l.b16 %v775
        %v851 = vunpack.c.l.b16 %v776
        %v852 = vunpack.c.h.b16 %v776
        %v853 = vunpack.c.l.b16 %v777
        %v854 = vunpack.c.l.b16 %v778
        %v855 = vunpack.c.h.b16 %v778
        %v856 = vunpack.c.l.b16 %v779
        %v857 = vunpack.c.l.b16 %v780
        %v858 = vunpack.c.h.b16 %v780
        %v859 = vunpack.c.l.b16 %v781
        %v860 = vunpack.c.l.b16 %v782
        %v861 = vunpack.c.h.b16 %v782
        %v862 = vunpack.c.l.b16 %v783
        %v863 = vunpack.c.l.b16 %v784
        %v864 = vunpack.c.h.b16 %v784
        %v865 = vunpack.c.l.b16 %v785
        %v866 = vpack.c.b16 %v821, %v818
        %v867 = vpack.c.b16 %v822, %v819
        %v868 = vpack.c.b16 %v823, %v820
        %v869 = vpack.c.b16 %v827, %v824
        %v870 = vpack.c.b16 %v828, %v825
        %v871 = vpack.c.b16 %v829, %v826
        %v872 = vpack.c.b16 %v833, %v830
        %v873 = vpack.c.b16 %v834, %v831
        %v874 = vpack.c.b16 %v835, %v832
        %v875 = vpack.c.b16 %v839, %v836
        %v876 = vpack.c.b16 %v840, %v837
        %v877 = vpack.c.b16 %v841, %v838
        %v878 = vpack.c.b16 %v845, %v842
        %v879 = vpack.c.b16 %v846, %v843
        %v880 = vpack.c.b16 %v847, %v844
        %v881 = vpack.c.b16 %v851, %v848
        %v882 = vpack.c.b16 %v852, %v849
        %v883 = vpack.c.b16 %v853, %v850
        %v884 = vpack.c.b16 %v857, %v854
        %v885 = vpack.c.b16 %v858, %v855
        %v886 = vpack.c.b16 %v859, %v856
        %v887 = vpack.c.b16 %v863, %v860
        %v888 = vpack.c.b16 %v864, %v861
        %v889 = vpack.c.b16 %v865, %v862
        %914 = vmatprep.subr.bf16.mxu0 %v867
        %915 = vmatpush1.bf16.msra.mxu0 %v866
        %916 = vmatprep.subr.bf16.mxu0 %v870
        %917 = vmatpush1.bf16.msra.mxu0 %v869
        %918 = vmatprep.subr.bf16.mxu0 %v873
        %919 = vmatpush1.bf16.msra.mxu0 %v872
        %920 = vmatprep.subr.bf16.mxu0 %v876
        %921 = vmatpush1.bf16.msra.mxu0 %v875
        %922 = vmatprep.subr.bf16.mxu0 %v879
        %923 = vmatpush1.bf16.msra.mxu0 %v878
        %924 = vmatprep.subr.bf16.mxu0 %v882
        %925 = vmatpush1.bf16.msra.mxu0 %v881
        %926 = vmatprep.subr.bf16.mxu0 %v885
        %927 = vmatpush1.bf16.msra.mxu0 %v884
        %928 = vmatprep.subr.bf16.mxu0 %v888
        %929 = vmatpush1.bf16.msra.mxu0 %v887
        %930 = vmatprep.subr.bf16.mxu0 0
        %931 = vmatpush1.bf16.msra.mxu0 0
        %932 = vmatprep.subr.bf16.mxu0 0
        %933 = vmatpush1.bf16.msra.mxu0 0
        %934 = vmatprep.subr.bf16.mxu0 0
        %935 = vmatpush1.bf16.msra.mxu0 0
        %936 = vmatprep.subr.bf16.mxu0 0
        %937 = vmatpush1.bf16.msra.mxu0 0
        %938 = vmatprep.subr.bf16.mxu0 0
        %939 = vmatpush1.bf16.msra.mxu0 0
        %940 = vmatprep.subr.bf16.mxu0 0
        %941 = vmatpush1.bf16.msra.mxu0 0
        %942 = vmatprep.subr.bf16.mxu0 0
        %943 = vmatpush1.bf16.msra.mxu0 0
        %944 = vmatprep.subr.bf16.mxu0 0
        %945 = vmatpush1.bf16.msra.mxu0 0
        %946 = vmatprep.mubr.bf16.mxu0 0
        %947 = vmatmul.mubr.bf16.gmra.mrb[0].mxu0 %v750
        %v948 = vpop.f32.mrb[0].mxu0
        %v949 = vadd.f32 0.0, %v948
        %v950 = vpop.f32.mrb[0].mxu0
        %v951 = vadd.f32 0.0, %v950
        %v952 = vpop.f32.mrb[0].mxu0
        %v953 = vadd.f32 0.0, %v952
        %v954 = vpop.f32.mrb[0].mxu0
        %v955 = vadd.f32 0.0, %v954
        %956 = vmatprep.mubr.bf16.mxu0 0
        %957 = vmatmul.mubr.bf16.gmra.mrb[0].mxu0 %v751
        %v958 = vpop.f32.mrb[0].mxu0
        %v959 = vadd.f32 0.0, %v958
        %v960 = vpop.f32.mrb[0].mxu0
        %v961 = vadd.f32 0.0, %v960
        %v962 = vpop.f32.mrb[0].mxu0
        %v963 = vadd.f32 0.0, %v962
        %v964 = vpop.f32.mrb[0].mxu0
        %v965 = vadd.f32 0.0, %v964
        %966 = vmatprep.mubr.bf16.mxu0 0
        %967 = vmatmul.mubr.bf16.gmra.mrb[0].mxu0 %v752
        %v968 = vpop.f32.mrb[0].mxu0
        %v969 = vadd.f32 0.0, %v968
        %v970 = vpop.f32.mrb[0].mxu0
        %v971 = vadd.f32 0.0, %v970
        %v972 = vpop.f32.mrb[0].mxu0
        %v973 = vadd.f32 0.0, %v972
        %v974 = vpop.f32.mrb[0].mxu0
        %v975 = vadd.f32 0.0, %v974
        %976 = vmatprep.mubr.bf16.mxu0 0
        %977 = vmatmul.mubr.bf16.gmra.mrb[0].mxu0 %v753
        %v978 = vpop.f32.mrb[0].mxu0
        %v979 = vadd.f32 0.0, %v978
        %v980 = vpop.f32.mrb[0].mxu0
        %v981 = vadd.f32 0.0, %v980
        %v982 = vpop.f32.mrb[0].mxu0
        %v983 = vadd.f32 0.0, %v982
        %v984 = vpop.f32.mrb[0].mxu0
        %v985 = vadd.f32 0.0, %v984
        %986 = vdwg.mxu0
        %987 = vmatprep.subr.bf16.mxu0 0
        %988 = vmatpush1.bf16.msra.mxu0 %v868
        %989 = vmatprep.subr.bf16.mxu0 0
        %990 = vmatpush1.bf16.msra.mxu0 %v871
        %991 = vmatprep.subr.bf16.mxu0 0
        %992 = vmatpush1.bf16.msra.mxu0 %v874
        %993 = vmatprep.subr.bf16.mxu0 0
        %994 = vmatpush1.bf16.msra.mxu0 %v877
        %995 = vmatprep.subr.bf16.mxu0 0
        %996 = vmatpush1.bf16.msra.mxu0 %v880
        %997 = vmatprep.subr.bf16.mxu0 0
        %998 = vmatpush1.bf16.msra.mxu0 %v883
        %999 = vmatprep.subr.bf16.mxu0 0
        %1000 = vmatpush1.bf16.msra.mxu0 %v886
        %1001 = vmatprep.subr.bf16.mxu0 0
        %1002 = vmatpush1.bf16.msra.mxu0 %v889
        %1003 = vmatprep.subr.bf16.mxu0 0
        %1004 = vmatpush1.bf16.msra.mxu0 0
        %1005 = vmatprep.subr.bf16.mxu0 0
        %1006 = vmatpush1.bf16.msra.mxu0 0
        %1007 = vmatprep.subr.bf16.mxu0 0
        %1008 = vmatpush1.bf16.msra.mxu0 0
        %1009 = vmatprep.subr.bf16.mxu0 0
        %1010 = vmatpush1.bf16.msra.mxu0 0
        %1011 = vmatprep.subr.bf16.mxu0 0
        %1012 = vmatpush1.bf16.msra.mxu0 0
        %1013 = vmatprep.subr.bf16.mxu0 0
        %1014 = vmatpush1.bf16.msra.mxu0 0
        %1015 = vmatprep.subr.bf16.mxu0 0
        %1016 = vmatpush1.bf16.msra.mxu0 0
        %1017 = vmatprep.subr.bf16.mxu0 0
        %1018 = vmatpush1.bf16.msra.mxu0 0
        %1019 = vmatprep.mubr.bf16.mxu0 0
        %1020 = vmatmul.mubr.bf16.gmra.mrb[0].mxu0 %v750
        %v1021 = vpop.f32.mrb[0].mxu0
        %v1022 = vadd.f32 0.0, %v1021
        %v1023 = vpop.f32.mrb[0].mxu0
        %v1024 = vpop.f32.mrb[0].mxu0
        %v1025 = vadd.f32 0.0, %v1024
        %v1026 = vpop.f32.mrb[0].mxu0
        %1027 = vmatprep.mubr.bf16.mxu0 0
        %1028 = vmatmul.mubr.bf16.gmra.mrb[0].mxu0 %v751
        %v1029 = vpop.f32.mrb[0].mxu0
        %v1030 = vadd.f32 0.0, %v1029
        %v1031 = vpop.f32.mrb[0].mxu0
        %v1032 = vpop.f32.mrb[0].mxu0
        %v1033 = vadd.f32 0.0, %v1032
        %v1034 = vpop.f32.mrb[0].mxu0
        %1035 = vmatprep.mubr.bf16.mxu0 0
        %1036 = vmatmul.mubr.bf16.gmra.mrb[0].mxu0 %v752
        %v1037 = vpop.f32.mrb[0].mxu0
        %v1038 = vadd.f32 0.0, %v1037
        %v1039 = vpop.f32.mrb[0].mxu0
        %v1040 = vpop.f32.mrb[0].mxu0
        %v1041 = vadd.f32 0.0, %v1040
        %v1042 = vpop.f32.mrb[0].mxu0
        %1043 = vmatprep.mubr.bf16.mxu0 0
        %1044 = vmatmul.mubr.bf16.gmra.mrb[0].mxu0 %v753
        %v1045 = vpop.f32.mrb[0].mxu0
        %v1046 = vadd.f32 0.0, %v1045
        %v1047 = vpop.f32.mrb[0].mxu0
        %v1048 = vpop.f32.mrb[0].mxu0
        %v1049 = vadd.f32 0.0, %v1048
        %v1050 = vpop.f32.mrb[0].mxu0
        %1051 = vdwg.mxu0
        %vm1052 = vcmp.ge.s32.totalorder %v390, 2
        %vm1053 = vcmp.ge.s32.totalorder %v391, 2
        %vm1054 = vcmp.ge.s32.totalorder %v392, 2
        %vm1055 = vcmp.ge.s32.totalorder %v393, 2
        %vm1056 = vcmp.ge.s32.totalorder %v394, 2
        %vm1057 = vcmp.ge.s32.totalorder %v395, 2
        %vm1058 = vcmp.ge.s32.totalorder %v396, 2
        %vm1059 = vcmp.ge.s32.totalorder %v397, 2
        %v1060 = vrot.slane %v949, 6
        %v1061 = vrot.slane %v953, 6
        %v1062 = vrot.slane %v959, 6
        %v1063 = vrot.slane %v963, 6
        %v1064 = vrot.slane %v969, 6
        %v1065 = vrot.slane %v973, 6
        %v1066 = vrot.slane %v979, 6
        %v1067 = vrot.slane %v983, 6
        %vm1068 = vcmp.lt.s32.totalorder %v294, 2
        %v1069 = vsel %vm1068, %v1066, %v1067
        %v1070 = vsel %vm1068, %v1065, %v1066
        %v1071 = vsel %vm1068, %v1064, %v1065
        %v1072 = vsel %vm1068, %v1063, %v1064
        %v1073 = vsel %vm1068, %v1062, %v1063
        %v1074 = vsel %vm1068, %v1061, %v1062
        %v1075 = vsel %vm1068, %v1060, %v1061
        %v1076 = vsel %vm1068, %v1067, %v1060
        %v1077 = vsel %vm1052, 1, 0
        %v1078 = vsel %vm1053, 1, 0
        %v1079 = vsel %vm1054, 1, 0
        %v1080 = vsel %vm1055, 1, 0
        %v1081 = vsel %vm1056, 1, 0
        %v1082 = vsel %vm1057, 1, 0
        %v1083 = vsel %vm1058, 1, 0
        %v1084 = vsel %vm1059, 1, 0
        %vm1085 = vcmp.eq.s32.totalorder %v1077, 1
        %vm1086 = vcmp.eq.s32.totalorder %v1078, 1
        %vm1087 = vcmp.eq.s32.totalorder %v1079, 1
        %vm1088 = vcmp.eq.s32.totalorder %v1080, 1
        %vm1089 = vcmp.eq.s32.totalorder %v1081, 1
        %vm1090 = vcmp.eq.s32.totalorder %v1082, 1
        %vm1091 = vcmp.eq.s32.totalorder %v1083, 1
        %vm1092 = vcmp.eq.s32.totalorder %v1084, 1
        %v1093 = vsel %vm1085, %v1076, 0.0
        %v1094 = vsel %vm1086, %v1075, 0.0
        %v1095 = vsel %vm1087, %v1074, 0.0
        %v1096 = vsel %vm1088, %v1073, 0.0
        %v1097 = vsel %vm1089, %v1072, 0.0
        %v1098 = vsel %vm1090, %v1071, 0.0
        %v1099 = vsel %vm1091, %v1070, 0.0
        %v1100 = vsel %vm1092, %v1069, 0.0
        %v1101 = vadd.f32 %v951, %v1093
        %v1102 = vadd.f32 %v955, %v1094
        %v1103 = vadd.f32 %v961, %v1095
        %v1104 = vadd.f32 %v965, %v1096
        %v1105 = vadd.f32 %v971, %v1097
        %v1106 = vadd.f32 %v975, %v1098
        %v1107 = vadd.f32 %v981, %v1099
        %v1108 = vadd.f32 %v985, %v1100
        %vm1109 = vcmp.le.s32.totalorder %v390, 4
        %vm1110 = vcmp.le.s32.totalorder %v391, 4
        %vm1111 = vcmp.le.s32.totalorder %v392, 4
        %vm1112 = vcmp.le.s32.totalorder %v393, 4
        %vm1113 = vcmp.le.s32.totalorder %v394, 4
        %vm1114 = vcmp.le.s32.totalorder %v395, 4
        %vm1115 = vcmp.le.s32.totalorder %v396, 4
        %vm1116 = vcmp.le.s32.totalorder %v397, 4
        %v1117 = vrot.slane %v1022, 2
        %v1118 = vrot.slane %v1025, 2
        %v1119 = vrot.slane %v1030, 2
        %v1120 = vrot.slane %v1033, 2
        %v1121 = vrot.slane %v1038, 2
        %v1122 = vrot.slane %v1041, 2
        %v1123 = vrot.slane %v1046, 2
        %v1124 = vrot.slane %v1049, 2
        %vm1125 = vcmp.lt.s32.totalorder %v294, 6
        %v1126 = vsel %vm1125, %v1123, %v1124
        %v1127 = vsel %vm1125, %v1122, %v1123
        %v1128 = vsel %vm1125, %v1121, %v1122
        %v1129 = vsel %vm1125, %v1120, %v1121
        %v1130 = vsel %vm1125, %v1119, %v1120
        %v1131 = vsel %vm1125, %v1118, %v1119
        %v1132 = vsel %vm1125, %v1117, %v1118
        %v1133 = vsel %vm1125, %v1124, %v1117
        %v1134 = vsel %vm1109, 1, 0
        %v1135 = vsel %vm1110, 1, 0
        %v1136 = vsel %vm1111, 1, 0
        %v1137 = vsel %vm1112, 1, 0
        %v1138 = vsel %vm1113, 1, 0
        %v1139 = vsel %vm1114, 1, 0
        %v1140 = vsel %vm1115, 1, 0
        %v1141 = vsel %vm1116, 1, 0
        %vm1142 = vcmp.eq.s32.totalorder %v1134, 1
        %vm1143 = vcmp.eq.s32.totalorder %v1135, 1
        %vm1144 = vcmp.eq.s32.totalorder %v1136, 1
        %vm1145 = vcmp.eq.s32.totalorder %v1137, 1
        %vm1146 = vcmp.eq.s32.totalorder %v1138, 1
        %vm1147 = vcmp.eq.s32.totalorder %v1139, 1
        %vm1148 = vcmp.eq.s32.totalorder %v1140, 1
        %vm1149 = vcmp.eq.s32.totalorder %v1141, 1
        %v1150 = vsel %vm1142, %v1132, 0.0
        %v1151 = vsel %vm1143, %v1131, 0.0
        %v1152 = vsel %vm1144, %v1130, 0.0
        %v1153 = vsel %vm1145, %v1129, 0.0
        %v1154 = vsel %vm1146, %v1128, 0.0
        %v1155 = vsel %vm1147, %v1127, 0.0
        %v1156 = vsel %vm1148, %v1126, 0.0
        %v1157 = vsel %vm1149, %v1133, 0.0
        %v1158 = vadd.f32 %v1101, %v1150
        %v1159 = vadd.f32 %v1102, %v1151
        %v1160 = vadd.f32 %v1103, %v1152
        %v1161 = vadd.f32 %v1104, %v1153
        %v1162 = vadd.f32 %v1105, %v1154
        %v1163 = vadd.f32 %v1106, %v1155
        %v1164 = vadd.f32 %v1107, %v1156
        %v1165 = vadd.f32 %v1108, %v1157
        %v1166 = vld [vmem:[%s4] sm:$0x1]
        %v1168 = vlaneseq
        %v1169 = vshrl.u32 %v1168, 7
        %v1170 = vsub.s32 0, %v1169
        %v1171 = vrot.slane %v1166, %v1170
        %v1173 = vadd.f32 %v1158, %v1171
        %v1174 = vadd.f32 %v1159, %v1171
        %v1175 = vadd.f32 %v1160, %v1171
        %v1176 = vadd.f32 %v1161, %v1171
        %v1177 = vadd.f32 %v1162, %v1171
        %v1178 = vadd.f32 %v1163, %v1171
        %v1179 = vadd.f32 %v1164, %v1171
        %v1180 = vadd.f32 %v1165, %v1171
        %v1181 = vmax.f32 %v1173, 0.0
        %v1182 = vmax.f32 %v1174, 0.0
        %v1183 = vmax.f32 %v1175, 0.0
        %v1184 = vmax.f32 %v1176, 0.0
        %v1185 = vmax.f32 %v1177, 0.0
        %v1186 = vmax.f32 %v1178, 0.0
        %v1187 = vmax.f32 %v1179, 0.0
        %v1188 = vmax.f32 %v1180, 0.0
        %v1189 = vrot.slane %v1181, 2
        %v1190 = vrot.slane %v1182, 2
        %v1191 = vrot.slane %v1183, 2
        %v1192 = vrot.slane %v1184, 2
        %v1193 = vrot.slane %v1185, 2
        %v1194 = vrot.slane %v1186, 2
        %v1195 = vrot.slane %v1187, 2
        %v1196 = vrot.slane %v1188, 2
        %v1197 = vsel %vm1125, %v1195, %v1196
        %v1198 = vsel %vm1125, %v1194, %v1195
        %v1199 = vsel %vm1125, %v1193, %v1194
        %v1200 = vsel %vm1125, %v1192, %v1193
        %v1201 = vsel %vm1125, %v1191, %v1192
        %v1202 = vsel %vm1125, %v1190, %v1191
        %v1203 = vsel %vm1125, %v1189, %v1190
        %v1204 = vsel %vm1125, %v1196, %v1189
        %v1205 = vmax.f32 %v1181, %v1203
        %v1206 = vmax.f32 %v1182, %v1202
        %v1207 = vmax.f32 %v1183, %v1201
        %v1208 = vmax.f32 %v1184, %v1200
        %v1209 = vmax.f32 %v1185, %v1199
        %v1210 = vmax.f32 %v1186, %v1198
        %v1211 = vmax.f32 %v1187, %v1197
        %v1212 = vmax.f32 %v1188, %v1204
        %v1213 = vlaneseq
        %v1214 = vand.u32 %v1213, 127
        %v1215 = vmul.u32 %v294, 8
        %v1216 = vsub.s32 %v1214, %v1215
        %vm1217 = vcmp.ge.s32.totalorder %v1216, 0
        %vm1218 = vcmp.lt.s32.totalorder %v1216, 8
        %vm1219 = vmand %vm1217, %vm1218
        %vm1220 = vcmp.lt.s32.totalorder %v1216, 0
        %v1221 = vsub.s32 0, %v1216
        %v1222 = vsel %vm1220, %v1221, %v1216
        %v1223 = vshrl.u32 %v1222, 2
        %v1224 = vand.u32 %v1222, 3
        %v1225 = vsub.s32 0, %v1224
        %v1226 = vsel %vm1220, %v1225, %v1224
        %vm1227 = vcmp.ne.s32.totalorder %v1226, 0
        %vm1228 = vcmp.lt.s32.totalorder %v1226, 0
        %vm1229 = vmand %vm1228, %vm1227
        %v1230 = vadd.s32 %v1226, 4
        %v1231 = vsel %vm1229, %v1230, %v1226
        %vm1232 = vcmp.eq.s32.totalorder %v1231, 0
        %vm1233 = vmand %vm1219, %vm1232
        %v1234 = vsel %vm1233, 1, 0
        %v1235 = vcvt.s32.f32 %v1234
        %v1236 = vpack.c.bf16 %v1235, %v1235
        %v1237 = vmul.bf16 %v1236, 1056980736
        %v1238 = vpack.c.bf16 %v1206, %v1205
        %v1239 = vpack.c.bf16 %v1208, %v1207
        %v1240 = vpack.c.bf16 %v1210, %v1209
        %v1241 = vpack.c.bf16 %v1212, %v1211
        %vm1242 = vcmask 523264
        %v1244 = vsel %vm1242, %v1237, 0
        %1246 = vmatprep.subr.bf16.mxu0 0
        %1247 = vmatpush1.bf16.msra.mxu0 %v1238
        %1248 = vmatprep.subr.bf16.mxu0 0
        %1249 = vmatpush1.bf16.msra.mxu0 %v1239
        %1250 = vmatprep.subr.bf16.mxu0 0
        %1251 = vmatpush1.bf16.msra.mxu0 %v1240
        %1252 = vmatprep.subr.bf16.mxu0 0
        %1253 = vmatpush1.bf16.msra.mxu0 %v1241
        %1254 = vmatprep.subr.bf16.mxu0 0
        %1255 = vmatpush1.bf16.msra.mxu0 0
        %1256 = vmatprep.subr.bf16.mxu0 0
        %1257 = vmatpush1.bf16.msra.mxu0 0
        %1258 = vmatprep.subr.bf16.mxu0 0
        %1259 = vmatpush1.bf16.msra.mxu0 0
        %1260 = vmatprep.subr.bf16.mxu0 0
        %1261 = vmatpush1.bf16.msra.mxu0 0
        %1262 = vmatprep.subr.bf16.mxu0 0
        %1263 = vmatpush1.bf16.msra.mxu0 0
        %1264 = vmatprep.subr.bf16.mxu0 0
        %1265 = vmatpush1.bf16.msra.mxu0 0
        %1266 = vmatprep.subr.bf16.mxu0 0
        %1267 = vmatpush1.bf16.msra.mxu0 0
        %1268 = vmatprep.subr.bf16.mxu0 0
        %1269 = vmatpush1.bf16.msra.mxu0 0
        %1270 = vmatprep.subr.bf16.mxu0 0
        %1271 = vmatpush1.bf16.msra.mxu0 0
        %1272 = vmatprep.subr.bf16.mxu0 0
        %1273 = vmatpush1.bf16.msra.mxu0 0
        %1274 = vmatprep.subr.bf16.mxu0 0
        %1275 = vmatpush1.bf16.msra.mxu0 0
        %1276 = vmatprep.subr.bf16.mxu0 0
        %1277 = vmatpush1.bf16.msra.mxu0 0
        %1278 = vmatprep.mubr.bf16.mxu0 0
        %1279 = vmatmul.mubr.bf16.gmra.mrb[0].mxu0 %v1244
        %v1280 = vpop.f32.mrb[0].mxu0
        %v1281 = vadd.f32 0.0, %v1280
        %v1282 = vpop.f32.mrb[0].mxu0
        %v1283 = vpop.f32.mrb[0].mxu0
        %v1284 = vpop.f32.mrb[0].mxu0
        %1285 = vdwg.mxu0
        %v1286 = vpack.c.bf16 %v1281, %v1281
        %v1287 = vld [vmem:[%s5] sm:$0xf]
        %v1288 = vld [vmem:[%s5 + $0x4] sm:$0xf]
        %v1289 = vld [vmem:[%s5 + $0x8] sm:$0xf]
        %v1290 = vld [vmem:[%s5 + $0xc] sm:$0xf]
        %v1291 = vld [vmem:[%s5 + $0x10] sm:$0xf]
        %v1292 = vld [vmem:[%s5 + $0x14] sm:$0xf]
        %v1293 = vld [vmem:[%s5 + $0x18] sm:$0xf]
        %v1294 = vld [vmem:[%s5 + $0x1c] sm:$0xf]
        %v1295 = vld [vmem:[%s5 + $0x20] sm:$0xf]
        %v1296 = vld [vmem:[%s5 + $0x24] sm:$0xf]
        %v1297 = vld [vmem:[%s5 + $0x28] sm:$0xf]
        %v1298 = vld [vmem:[%s5 + $0x2c] sm:$0xf]
        %v1299 = vld [vmem:[%s5 + $0x30] sm:$0xf]
        %v1300 = vld [vmem:[%s5 + $0x34] sm:$0xf]
        %v1301 = vld [vmem:[%s5 + $0x38] sm:$0xf]
        %v1302 = vld [vmem:[%s5 + $0x3c] sm:$0xf]
        %v1303 = vld [vmem:[%s6] sm:$0x1]
        %v1305 = vlaneseq
        %v1306 = vshrl.u32 %v1305, 7
        %v1307 = vsub.s32 0, %v1306
        %v1308 = vrot.slane %v1303, %v1307
        %v1326 = vunpack.c.l.b16 %v1287
        %v1327 = vunpack.c.l.b16 %v1288
        %v1328 = vunpack.c.l.b16 %v1289
        %v1329 = vunpack.c.l.b16 %v1290
        %v1330 = vunpack.c.l.b16 %v1291
        %v1331 = vunpack.c.l.b16 %v1292
        %v1332 = vunpack.c.l.b16 %v1293
        %v1333 = vunpack.c.l.b16 %v1294
        %v1334 = vunpack.c.l.b16 %v1295
        %v1335 = vunpack.c.l.b16 %v1296
        %v1336 = vunpack.c.l.b16 %v1297
        %v1337 = vunpack.c.l.b16 %v1298
        %v1338 = vunpack.c.l.b16 %v1299
        %v1339 = vunpack.c.l.b16 %v1300
        %v1340 = vunpack.c.l.b16 %v1301
        %v1341 = vunpack.c.l.b16 %v1302
        %v1342 = vpack.c.b16 %v1327, %v1326
        %v1343 = vpack.c.b16 %v1329, %v1328
        %v1344 = vpack.c.b16 %v1331, %v1330
        %v1345 = vpack.c.b16 %v1333, %v1332
        %v1346 = vpack.c.b16 %v1335, %v1334
        %v1347 = vpack.c.b16 %v1337, %v1336
        %v1348 = vpack.c.b16 %v1339, %v1338
        %v1349 = vpack.c.b16 %v1341, %v1340
        %1358 = vmatprep.subr.bf16.mxu0 0
        %1359 = vmatpush1.bf16.msra.mxu0 %v1342
        %1360 = vmatprep.subr.bf16.mxu0 0
        %1361 = vmatpush1.bf16.msra.mxu0 %v1343
        %1362 = vmatprep.subr.bf16.mxu0 0
        %1363 = vmatpush1.bf16.msra.mxu0 %v1344
        %1364 = vmatprep.subr.bf16.mxu0 0
        %1365 = vmatpush1.bf16.msra.mxu0 %v1345
        %1366 = vmatprep.subr.bf16.mxu0 0
        %1367 = vmatpush1.bf16.msra.mxu0 %v1346
        %1368 = vmatprep.subr.bf16.mxu0 0
        %1369 = vmatpush1.bf16.msra.mxu0 %v1347
        %1370 = vmatprep.subr.bf16.mxu0 0
        %1371 = vmatpush1.bf16.msra.mxu0 %v1348
        %1372 = vmatprep.subr.bf16.mxu0 0
        %1373 = vmatpush1.bf16.msra.mxu0 %v1349
        %1374 = vmatprep.subr.bf16.mxu0 0
        %1375 = vmatpush1.bf16.msra.mxu0 0
        %1376 = vmatprep.subr.bf16.mxu0 0
        %1377 = vmatpush1.bf16.msra.mxu0 0
        %1378 = vmatprep.subr.bf16.mxu0 0
        %1379 = vmatpush1.bf16.msra.mxu0 0
        %1380 = vmatprep.subr.bf16.mxu0 0
        %1381 = vmatpush1.bf16.msra.mxu0 0
        %1382 = vmatprep.subr.bf16.mxu0 0
        %1383 = vmatpush1.bf16.msra.mxu0 0
        %1384 = vmatprep.subr.bf16.mxu0 0
        %1385 = vmatpush1.bf16.msra.mxu0 0
        %1386 = vmatprep.subr.bf16.mxu0 0
        %1387 = vmatpush1.bf16.msra.mxu0 0
        %1388 = vmatprep.subr.bf16.mxu0 0
        %1389 = vmatpush1.bf16.msra.mxu0 0
        %1390 = vmatprep.mubr.bf16.mxu0 0
        %1391 = vmatmul.mubr.bf16.gmra.mrb[0].mxu0 %v1286
        %v1392 = vpop.f32.mrb[0].mxu0
        %v1393 = vadd.f32 %v1308, %v1392
        %v1394 = vpop.f32.mrb[0].mxu0
        %v1395 = vpop.f32.mrb[0].mxu0
        %v1396 = vpop.f32.mrb[0].mxu0
        %1397 = vdwg.mxu0
        %vm1398 = vcmask 130048
        %1399 = vst.msk [vmem:[%s272] sm:$0xff] %vm1398, %v1393
        %s1400 = sand.u32 %s181, 1
        %s1401 = scalar_lea.sflag [#allocation3], %s1400
        %s1402 = sand.u32 %s181, 1
        %s1403 = smul.addr %s1402, 8
        %s1404 = scalar_lea.vmem [#allocation2], %s1403
        // Predicated region
        $region49: #{tpu_custom_call.1} parent=47 // pred_check
          %p1405 = pneg %p191
        $region50: #{tpu_custom_call.1} parent=47 // pred_check_branch
          %1407 = sbr.rel (%p1405) target = $region52
        $region51: #{tpu_custom_call.1} parent=47 // pred_region
          %s1409 = ssub.s32 128, 128
          %1410 = vsyncadd %s1401, %s1409
          %s1411 = smul.addr %s21, 128
          %s1412 = scalar_lea.hbm %s7, %s1411
          %s1414 = sshll.u32 %s1404, 4
          %s1415 = int_to_ptr.vmem [resolvable:$true] %s1414
          %1417 = dma.vmem_to_hbm [thread:$0]  %s1415, 128, %s1412, %s1401
        $region52: #{tpu_custom_call.1} parent=47 // pred_fallthru
          _
      $region48: #{tpu_custom_call.1} parent=5 // pred_fallthru
        _
      %p1418 = scmp.le.s32.totalorder 2, %s16
      // Predicated region
      $region53: #{tpu_custom_call.1} parent=5 // pred_check
        %p1419 = pneg %p1418
      $region54: #{tpu_custom_call.1} parent=5 // pred_check_branch
        %1421 = sbr.rel (%p1419) target = $region56
      $region55: #{tpu_custom_call.1} parent=5 // pred_region
        %s1422 = ssub.s32 %s16, 2
        // Predicated region
        $region57: #{tpu_custom_call.1} parent=55 // pred_check
          %p1423 = pneg %p197
        $region58: #{tpu_custom_call.1} parent=55 // pred_check_branch
          %1425 = sbr.rel (%p1423) target = $region60
        $region59: #{tpu_custom_call.1} parent=55 // pred_region
          %s1426 = sand.u32 %s182, 1
          %s1427 = scalar_lea.sflag [#allocation3], %s1426
          %s1428 = sand.u32 %s182, 1
          %s1429 = smul.addr %s1428, 8
          %s1430 = scalar_lea.vmem [#allocation2], %s1429
          %1431 = dma.done %s1427, 128
        $region60: #{tpu_custom_call.1} parent=55 // pred_fallthru
          _
      $region56: #{tpu_custom_call.1} parent=5 // pred_fallthru
        _
    $region6: #{tpu_custom_call.1} parent=1 // loop_footer
      %s20 = sadd.s32 1, %s16
    $region7: #{tpu_custom_call.1} parent=1 // loop_footer_branch
      %15 = sbr.rel target = $region3
    $region8: #{tpu_custom_call.1} parent=1 // loop_exit
      _
    %1432 = vsyncpa [#allocation3], 1
    %s1433 = scalar_lea.sflag [#allocation3], 1
    %1434 = vsyncpa %s1433, 1

</llo_original>
